<compile_context>
chip_gen: v7x
topology: tpu7x:2x2x1
jax: 0.10.0
libtpu: 0.0.40
codegen_flags: <defaults>
</compile_context>

<pallas_src>
import functools

import jax
import jax.numpy as jnp
import numpy as np
from jax import lax
from jax.experimental import pallas as pl
from jax.experimental.pallas import tpu as pltpu

_EPS = 1e-5  # torch.nn.BatchNorm1d default


# ------------------------------ in-kernel stage -------------------------------
def _conv_pool_bn(src_ref, buf_ref, m, S, w_ref, w0, bias, gamma, beta):
    """Conv1d(k=3,p=1) -> AvgPool1d(3,2,1) -> BatchNorm1d on a lane-packed slab.

    src_ref : ref with >= m+2 rows; rows 1..m hold the packed input (lane = p*32 + c,
              p = position-within-group 0..3, c = channel), rows 0 / m+1 are halos.
              Halo contents never affect the result (boundary taps are masked).
    buf_ref : VMEM scratch used to stage the conv output for the strided pool reads.
    m       : number of input rows (= B * L / 4).
    S       : rows per sample (= L / 4, a power of two).
    w_ref   : (14,128,128) bf16; indices w0 / w0+1 / w0+2 are centre / prev / next mats.
    bias, gamma, beta : (1,128) f32, per-channel values tiled across the 4 lane groups.
    Returns the (m//2, 128) float32 normalized slab.
    """
    # --- Conv1d: centre + previous-row + next-row packed matmuls -----------------
    r = lax.broadcasted_iota(jnp.int32, (m, 1), 0) & (S - 1)
    xu = jnp.where(r != 0, src_ref[pl.ds(0, m), :], 0.0).astype(jnp.bfloat16)
    xm = src_ref[pl.ds(1, m), :].astype(jnp.bfloat16)
    xd = jnp.where(r != S - 1, src_ref[pl.ds(2, m), :], 0.0).astype(jnp.bfloat16)
    y = (jnp.dot(xm, w_ref[w0], preferred_element_type=jnp.float32)
         + jnp.dot(xu, w_ref[w0 + 1], preferred_element_type=jnp.float32)
         + jnp.dot(xd, w_ref[w0 + 2], preferred_element_type=jnp.float32)
         + bias)

    # --- AvgPool1d(k=3, stride=2, pad=1, count_include_pad): strided row reads ---
    buf_ref[pl.ds(1, m), :] = y                          # rows 0 / m+1 never contribute
    half = m // 2
    ya = buf_ref[pl.ds(1, half, stride=2), :]            # y rows 2G   (pos 8G .. 8G+3)
    yb = buf_ref[pl.ds(2, half, stride=2), :]            # y rows 2G+1 (pos 8G+4 .. 8G+7)
    yc = buf_ref[pl.ds(0, half, stride=2), :]            # y rows 2G-1 (pos 8G-4 .. 8G-1)
    so = S // 2
    g = lax.broadcasted_iota(jnp.int32, (half, 1), 0) & (so - 1)
    yc = jnp.where(g != 0, yc, 0.0)                      # left zero-pad at sample starts
    s1 = jnp.concatenate([ya[:, 0:32], ya[:, 64:96], yb[:, 0:32], yb[:, 64:96]], axis=-1)
    s2 = jnp.concatenate([ya[:, 32:64], ya[:, 96:128], yb[:, 32:64], yb[:, 96:128]], axis=-1)
    s0 = jnp.concatenate([yc[:, 96:128], s2[:, 0:96]], axis=-1)
    p = (s0 + s1 + s2) * (1.0 / 3.0)                     # (half, 128)

    # --- BatchNorm1d (training mode, biased variance): one-pass statistics -------
    st = jnp.concatenate([jnp.sum(p, axis=0, keepdims=True),
                          jnp.sum(p * p, axis=0, keepdims=True)], axis=0)    # (2,128)
    fold = st[:, 0:32] + st[:, 32:64] + st[:, 64:96] + st[:, 96:128]         # (2,32)
    st = jnp.concatenate([fold, fold, fold, fold], axis=-1)                  # (2,128)
    inv_cnt = 1.0 / float(half * 4)
    mean = st[0:1] * inv_cnt
    var = st[1:2] * inv_cnt - mean * mean
    scale = gamma * lax.rsqrt(var + _EPS)
    return p * scale + (beta - mean * scale)


# ---------------------------------- kernel ------------------------------------
def cnn2d_kernel(B, L0, x_ref, w_ref, c_ref, out_ref, buf_ref):
    zero_row = jnp.zeros((1, 128), jnp.float32)
    buf_ref[pl.ds(0, 1), :] = zero_row                   # top halo of the scratch

    m, S = B * L0 // 4, L0 // 4
    src = x_ref                                          # stage-1 input has host halos
    h = None
    for s in range(4):
        h = _conv_pool_bn(src, buf_ref, m, S, w_ref, 3 * s,
                          c_ref[pl.ds(s, 1), :],
                          c_ref[pl.ds(4 + s, 1), :],
                          c_ref[pl.ds(8 + s, 1), :])
        m, S = m // 2, S // 2
        if s < 3:
            buf_ref[pl.ds(1, m), :] = h                  # next stage's input, rows 1..m
            buf_ref[pl.ds(m + 1, 1), :] = zero_row       # re-zero the bottom halo
            src = buf_ref

    # --- fc: Linear(128,128) -> ReLU -> Linear(128,4) -> Softmax -----------------
    # h is (B, 128) with lane = l*32 + c; torch's c*4 + l flatten order is folded
    # into the host-side permutation of W1.
    hid = jnp.dot(h.astype(jnp.bfloat16), w_ref[12],
                  preferred_element_type=jnp.float32) + c_ref[pl.ds(12, 1), :]
    hid = jnp.maximum(hid, 0.0)                          # ReLU
    logits = jnp.dot(hid.astype(jnp.bfloat16), w_ref[13],
                     preferred_element_type=jnp.float32) + c_ref[pl.ds(13, 1), :]
    # Softmax over the 4 real classes; padded columns carry a -1e9 bias so exp -> 0.
    mx = jnp.max(logits, axis=-1, keepdims=True)
    e = jnp.exp(logits - mx)
    out_ref[...] = e / jnp.sum(e, axis=-1, keepdims=True)


# --------------------------------- wrapper -------------------------------------
def _pack_conv_weights(w):
    """(32, Cin, 3) conv weight -> centre / prev / next (128,128) packed matrices."""
    cout, cin, _ = w.shape
    wt = np.zeros((3, 32, cout), np.float32)
    wt[:, :cin, :] = np.transpose(np.asarray(w, np.float32), (2, 1, 0))   # [k, c, o]
    wm = np.zeros((4, 32, 4, 32), np.float32)            # [q, c, p, o]
    wp = np.zeros((4, 32, 4, 32), np.float32)
    wn = np.zeros((4, 32, 4, 32), np.float32)
    for p in range(4):
        for q in range(4):
            k = q - p + 1                                # within-row tap
            if 0 <= k <= 2:
                wm[q, :, p, :] = wt[k]
    wp[3, :, 0, :] = wt[0]                               # x[4g-1] -> out pos 4g   (k=0)
    wn[0, :, 3, :] = wt[2]                               # x[4g+4] -> out pos 4g+3 (k=2)
    return [wm.reshape(128, 128), wp.reshape(128, 128), wn.reshape(128, 128)]


def cnn2d_forward(x_ncl, params):
    """x_ncl: (B, 5, 64) float32 (PyTorch NCL layout)."""
    B, Cin, L0 = x_ncl.shape
    assert L0 == 64, "fc expects 32*4 features, i.e. input length 64"

    # Pack the input: (B, C, L) -> (B*L/4 + 2, 128), lane = p*32 + c, + halo rows.
    xt = jnp.transpose(x_ncl, (0, 2, 1)).astype(jnp.float32)          # (B, L, C)
    xt = jnp.pad(xt, ((0, 0), (0, 0), (0, 32 - Cin)))                 # channels -> 32
    xp = jnp.pad(xt.reshape(B * L0 // 4, 128), ((1, 1), (0, 0)))      # zero halo rows

    # Pack all matmul weights into one (14, 128, 128) bf16 array.
    wmats = []
    for (w, b, g, be) in params["convs"]:
        wmats += _pack_conv_weights(w)
    w1, b1, w2, b2 = params["fc"]
    hidden, ncls = w1.shape[0], w2.shape[0]               # 128, 4
    # w1: (hidden, 32*4) with input index c*4 + l  ->  row index l*32 + c.
    w1p = np.transpose(np.asarray(w1, np.float32).reshape(hidden, 32, 4),
                       (2, 1, 0)).reshape(128, hidden)
    w2p = np.zeros((hidden, 128), np.float32)
    w2p[:, :ncls] = np.asarray(w2, np.float32).T
    wmats += [w1p, w2p]
    w_all = jnp.asarray(np.stack(wmats, 0), dtype=jnp.bfloat16)       # (14,128,128)

    # Pack the small constants into one (14, 128) f32 array:
    #   rows 0-3 conv bias, 4-7 BN gamma, 8-11 BN beta (each tiled across the 4 lane
    #   groups), row 12 fc b1, row 13 fc b2 padded with -1e9 for the fake classes.
    consts = np.zeros((14, 128), np.float32)
    for s, (w, b, g, be) in enumerate(params["convs"]):
        consts[s] = np.tile(np.asarray(b, np.float32), 4)
        consts[4 + s] = np.tile(np.asarray(g, np.float32), 4)
        consts[8 + s] = np.tile(np.asarray(be, np.float32), 4)
    consts[12] = np.asarray(b1, np.float32)
    consts[13] = -1e9
    consts[13, :ncls] = np.asarray(b2, np.float32)
    c_all = jnp.asarray(consts)

    m1 = B * L0 // 4
    slab = (m1 + 2) * 128 * 4
    vmem_limit = int(min(100 * 2**20, 8 * 2**20 + 24 * slab))

    out = pl.pallas_call(
        functools.partial(cnn2d_kernel, B, L0),
        out_shape=jax.ShapeDtypeStruct((B, 128), jnp.float32),        # lane-dense out
        in_specs=[pl.BlockSpec(memory_space=pltpu.MemorySpace.VMEM)] * 3,
        out_specs=pl.BlockSpec(memory_space=pltpu.MemorySpace.VMEM),
        scratch_shapes=[pltpu.VMEM((m1 + 2, 128), jnp.float32)],
        compiler_params=pltpu.CompilerParams(vmem_limit_bytes=vmem_limit),
    )(xp, w_all, c_all)
    return out[:, :ncls]


# ---------------------------- pure-JAX reference --------------------------------
def reference_forward(x_ncl, params):
    h = x_ncl.astype(jnp.float32)
    for (w, b, g, be) in params["convs"]:
        L = h.shape[-1]
        hp = jnp.pad(h, ((0, 0), (0, 0), (1, 1)))
        y = jnp.zeros((h.shape[0], w.shape[0], L), jnp.float32)
        for k in range(3):
            y = y + jnp.einsum("bcl,oc->bol", hp[:, :, k:k + L], w[:, :, k])
        y = y + b[None, :, None]
        yp = jnp.pad(y, ((0, 0), (0, 0), (1, 1)))
        Lo = L // 2
        pooled = jnp.stack(
            [(yp[:, :, 2 * l] + yp[:, :, 2 * l + 1] + yp[:, :, 2 * l + 2]) / 3.0
             for l in range(Lo)], axis=-1)
        mean = jnp.mean(pooled, axis=(0, 2), keepdims=True)
        var = jnp.mean((pooled - mean) ** 2, axis=(0, 2), keepdims=True)
        h = (pooled - mean) / jnp.sqrt(var + _EPS) * g[None, :, None] + be[None, :, None]
    flat = h.reshape(h.shape[0], -1)          # matches torch .view: index c*4 + l
    w1, b1, w2, b2 = params["fc"]
    hid = jnp.maximum(flat @ w1.T + b1, 0.0)
    logits = hid @ w2.T + b2
    return jax.nn.softmax(logits, axis=1)


# ------------------------------ parameter init ----------------------------------
def init_params(key):
    params = {"convs": [], "fc": None}
    for cin in (5, 32, 32, 32):
        key, k1, k2, k3, k4 = jax.random.split(key, 5)
        s = 1.0 / np.sqrt(cin * 3)
        w = jax.random.uniform(k1, (32, cin, 3), jnp.float32, -s, s)
        b = jax.random.uniform(k2, (32,), jnp.float32, -s, s)
        g = 1.0 + 0.1 * jax.random.normal(k3, (32,), jnp.float32)
        be = 0.1 * jax.random.normal(k4, (32,), jnp.float32)
        params["convs"].append((w, b, g, be))
    key, k1, k2, k3, k4 = jax.random.split(key, 5)
    s = 1.0 / np.sqrt(128)
    w1 = jax.random.uniform(k1, (128, 128), jnp.float32, -s, s)
    b1 = jax.random.uniform(k2, (128,), jnp.float32, -s, s)
    w2 = jax.random.uniform(k3, (4, 128), jnp.float32, -s, s)
    b2 = jax.random.uniform(k4, (4,), jnp.float32, -s, s)
    params["fc"] = (w1, b1, w2, b2)
    return params


if __name__ == "__main__":
    key = jax.random.PRNGKey(0)
    key, kx = jax.random.split(key)
    B, C, L = 2, 5, 64   # length 64 -> 4 pooling stages -> 32*4 = 128 fc features
    x = jax.random.normal(kx, (B, C, L), jnp.float32)
    params = init_params(key)

    out = jax.block_until_ready(cnn2d_forward(x, params))
    ref = jax.block_until_ready(reference_forward(x, params))

    assert out.shape == (B, 4)
    # Kernel uses bf16 MXU operands (f32 accumulation); reference is pure f32,
    # so the tolerance reflects bf16 rounding through 4 conv/BN stages + the MLP.
    np.testing.assert_allclose(np.asarray(out), np.asarray(ref), atol=3e-2, rtol=3e-2)
    print("KERNEL_OK")
</pallas_src>

<mosaic_0001>
module attributes {stable_mosaic.version = 11 : i64} {
  func.func @cnn2d_kernel(%arg0: memref<34x128xf32, #tpu.memory_space<vmem>>, %arg1: memref<14x128x128xbf16, #tpu.memory_space<vmem>>, %arg2: memref<14x128xf32, #tpu.memory_space<vmem>>, %arg3: memref<2x128xf32, #tpu.memory_space<vmem>>, %arg4: memref<34x128xf32, #tpu.memory_space<vmem>>) attributes {dimension_semantics = [], scalar_prefetch = 0 : i64, scratch_operands = 1 : i64, tpu.core_type = #tpu.core_type<tc>} {
    %cst = arith.constant 0.000000e+00 : f32
    %0 = vector.broadcast %cst : f32 to vector<1x128xf32>
    %c0 = arith.constant 0 : index
    %c0_0 = arith.constant 0 : index
    %1 = vector.load %arg4[%c0, %c0_0] : memref<34x128xf32, #tpu.memory_space<vmem>>, vector<1x128xf32>
    tpu.vector_store %arg4[%c0, %c0_0], %0 {strides = array<i32>} : memref<34x128xf32, #tpu.memory_space<vmem>>, vector<1x128xf32>,
    %c0_1 = arith.constant 0 : index
    %c0_2 = arith.constant 0 : index
    %2 = vector.load %arg2[%c0_1, %c0_2] : memref<14x128xf32, #tpu.memory_space<vmem>>, vector<1x128xf32>
    %c4 = arith.constant 4 : index
    %c0_3 = arith.constant 0 : index
    %3 = vector.load %arg2[%c4, %c0_3] : memref<14x128xf32, #tpu.memory_space<vmem>>, vector<1x128xf32>
    %c8 = arith.constant 8 : index
    %c0_4 = arith.constant 0 : index
    %4 = vector.load %arg2[%c8, %c0_4] : memref<14x128xf32, #tpu.memory_space<vmem>>, vector<1x128xf32>
    %5 = tpu.iota {dimensions = array<i32: 0>} : vector<32x1xi32>
    %c15_i32 = arith.constant 15 : i32
    %6 = vector.broadcast %c15_i32 : i32 to vector<32x1xi32>
    %7 = arith.andi %5, %6 : vector<32x1xi32>
    %c0_i32 = arith.constant 0 : i32
    %8 = vector.broadcast %c0_i32 : i32 to vector<32x1xi32>
    %9 = arith.cmpi ne, %7, %8 : vector<32x1xi32>
    %c0_5 = arith.constant 0 : index
    %c0_6 = arith.constant 0 : index
    %10 = vector.load %arg0[%c0_5, %c0_6] : memref<34x128xf32, #tpu.memory_space<vmem>>, vector<32x128xf32>
    %cst_7 = arith.constant 0.000000e+00 : f32
    %11 = vector.shape_cast %9 : vector<32x1xi1> to vector<32x1xi1>
    %12 = vector.broadcast %11 : vector<32x1xi1> to vector<32x128xi1>
    %13 = vector.broadcast %cst_7 : f32 to vector<32x128xf32>
    %14 = arith.select %12, %10, %13 : vector<32x128xi1>, vector<32x128xf32>
    %15 = arith.truncf %14 : vector<32x128xf32> to vector<32x128xbf16>
    %c1 = arith.constant 1 : index
    %c0_8 = arith.constant 0 : index
    %16 = vector.load %arg0[%c1, %c0_8] : memref<34x128xf32, #tpu.memory_space<vmem>>, vector<32x128xf32>
    %17 = arith.truncf %16 : vector<32x128xf32> to vector<32x128xbf16>
    %c15_i32_9 = arith.constant 15 : i32
    %18 = vector.broadcast %c15_i32_9 : i32 to vector<32x1xi32>
    %19 = arith.cmpi ne, %7, %18 : vector<32x1xi32>
    %c2 = arith.constant 2 : index
    %c0_10 = arith.constant 0 : index
    %20 = vector.load %arg0[%c2, %c0_10] : memref<34x128xf32, #tpu.memory_space<vmem>>, vector<32x128xf32>
    %cst_11 = arith.constant 0.000000e+00 : f32
    %21 = vector.shape_cast %19 : vector<32x1xi1> to vector<32x1xi1>
    %22 = vector.broadcast %21 : vector<32x1xi1> to vector<32x128xi1>
    %23 = vector.broadcast %cst_11 : f32 to vector<32x128xf32>
    %24 = arith.select %22, %20, %23 : vector<32x128xi1>, vector<32x128xf32>
    %25 = arith.truncf %24 : vector<32x128xf32> to vector<32x128xbf16>
    %c0_12 = arith.constant 0 : index
    %c0_13 = arith.constant 0 : index
    %c0_14 = arith.constant 0 : index
    %26 = vector.load %arg1[%c0_12, %c0_13, %c0_14] : memref<14x128x128xbf16, #tpu.memory_space<vmem>>, vector<1x128x128xbf16>
    %27 = vector.shape_cast %26 : vector<1x128x128xbf16> to vector<128x128xbf16>
    %cst_15 = arith.constant dense<0.000000e+00> : vector<32x128xf32>
    %28 = tpu.matmul %17, %27, %cst_15 {dimension_numbers = #tpu.dot_dimension_numbers<[1], [0], [0], [1], [0, 0, 1, 1], [], []>} : vector<32x128xbf16>, vector<128x128xbf16>, vector<32x128xf32> -> vector<32x128xf32>
    %c1_16 = arith.constant 1 : index
    %c0_17 = arith.constant 0 : index
    %c0_18 = arith.constant 0 : index
    %29 = vector.load %arg1[%c1_16, %c0_17, %c0_18] : memref<14x128x128xbf16, #tpu.memory_space<vmem>>, vector<1x128x128xbf16>
    %30 = vector.shape_cast %29 : vector<1x128x128xbf16> to vector<128x128xbf16>
    %cst_19 = arith.constant dense<0.000000e+00> : vector<32x128xf32>
    %31 = tpu.matmul %15, %30, %cst_19 {dimension_numbers = #tpu.dot_dimension_numbers<[1], [0], [0], [1], [0, 0, 1, 1], [], []>} : vector<32x128xbf16>, vector<128x128xbf16>, vector<32x128xf32> -> vector<32x128xf32>
    %32 = arith.addf %28, %31 : vector<32x128xf32>
    %c2_20 = arith.constant 2 : index
    %c0_21 = arith.constant 0 : index
    %c0_22 = arith.constant 0 : index
    %33 = vector.load %arg1[%c2_20, %c0_21, %c0_22] : memref<14x128x128xbf16, #tpu.memory_space<vmem>>, vector<1x128x128xbf16>
    %34 = vector.shape_cast %33 : vector<1x128x128xbf16> to vector<128x128xbf16>
    %cst_23 = arith.constant dense<0.000000e+00> : vector<32x128xf32>
    %35 = tpu.matmul %25, %34, %cst_23 {dimension_numbers = #tpu.dot_dimension_numbers<[1], [0], [0], [1], [0, 0, 1, 1], [], []>} : vector<32x128xbf16>, vector<128x128xbf16>, vector<32x128xf32> -> vector<32x128xf32>
    %36 = arith.addf %32, %35 : vector<32x128xf32>
    %37 = vector.broadcast %2 : vector<1x128xf32> to vector<32x128xf32>
    %38 = arith.addf %36, %37 : vector<32x128xf32>
    %c1_24 = arith.constant 1 : index
    %c0_25 = arith.constant 0 : index
    %39 = vector.load %arg4[%c1_24, %c0_25] : memref<34x128xf32, #tpu.memory_space<vmem>>, vector<32x128xf32>
    tpu.vector_store %arg4[%c1_24, %c0_25], %38 {strides = array<i32>} : memref<34x128xf32, #tpu.memory_space<vmem>>, vector<32x128xf32>,
    %c1_26 = arith.constant 1 : index
    %c0_27 = arith.constant 0 : index
    %40 = tpu.strided_load %arg4[%c1_26, %c0_27] {strides = array<i32: 2, 1>} : memref<34x128xf32, #tpu.memory_space<vmem>>, vector<16x128xf32>
    %c2_28 = arith.constant 2 : index
    %c0_29 = arith.constant 0 : index
    %41 = tpu.strided_load %arg4[%c2_28, %c0_29] {strides = array<i32: 2, 1>} : memref<34x128xf32, #tpu.memory_space<vmem>>, vector<16x128xf32>
    %c0_30 = arith.constant 0 : index
    %c0_31 = arith.constant 0 : index
    %42 = tpu.strided_load %arg4[%c0_30, %c0_31] {strides = array<i32: 2, 1>} : memref<34x128xf32, #tpu.memory_space<vmem>>, vector<16x128xf32>
    %43 = tpu.iota {dimensions = array<i32: 0>} : vector<16x1xi32>
    %c7_i32 = arith.constant 7 : i32
    %44 = vector.broadcast %c7_i32 : i32 to vector<16x1xi32>
    %45 = arith.andi %43, %44 : vector<16x1xi32>
    %c0_i32_32 = arith.constant 0 : i32
    %46 = vector.broadcast %c0_i32_32 : i32 to vector<16x1xi32>
    %47 = arith.cmpi ne, %45, %46 : vector<16x1xi32>
    %cst_33 = arith.constant 0.000000e+00 : f32
    %48 = vector.shape_cast %47 : vector<16x1xi1> to vector<16x1xi1>
    %49 = vector.broadcast %48 : vector<16x1xi1> to vector<16x128xi1>
    %50 = vector.broadcast %cst_33 : f32 to vector<16x128xf32>
    %51 = arith.select %49, %42, %50 : vector<16x128xi1>, vector<16x128xf32>
    %52 = vector.extract_strided_slice %40 {offsets = [0, 0], sizes = [16, 32], strides = [1, 1]} : vector<16x128xf32> to vector<16x32xf32>
    %53 = vector.extract_strided_slice %40 {offsets = [0, 64], sizes = [16, 32], strides = [1, 1]} : vector<16x128xf32> to vector<16x32xf32>
    %54 = vector.extract_strided_slice %41 {offsets = [0, 0], sizes = [16, 32], strides = [1, 1]} : vector<16x128xf32> to vector<16x32xf32>
    %55 = vector.extract_strided_slice %41 {offsets = [0, 64], sizes = [16, 32], strides = [1, 1]} : vector<16x128xf32> to vector<16x32xf32>
    %56 = tpu.concatenate %52, %53, %54, %55 in 1 : vector<16x32xf32>, vector<16x32xf32>, vector<16x32xf32>, vector<16x32xf32> -> vector<16x128xf32>
    %57 = vector.extract_strided_slice %40 {offsets = [0, 32], sizes = [16, 32], strides = [1, 1]} : vector<16x128xf32> to vector<16x32xf32>
    %58 = vector.extract_strided_slice %40 {offsets = [0, 96], sizes = [16, 32], strides = [1, 1]} : vector<16x128xf32> to vector<16x32xf32>
    %59 = vector.extract_strided_slice %41 {offsets = [0, 32], sizes = [16, 32], strides = [1, 1]} : vector<16x128xf32> to vector<16x32xf32>
    %60 = vector.extract_strided_slice %41 {offsets = [0, 96], sizes = [16, 32], strides = [1, 1]} : vector<16x128xf32> to vector<16x32xf32>
    %61 = tpu.concatenate %57, %58, %59, %60 in 1 : vector<16x32xf32>, vector<16x32xf32>, vector<16x32xf32>, vector<16x32xf32> -> vector<16x128xf32>
    %62 = vector.extract_strided_slice %51 {offsets = [0, 96], sizes = [16, 32], strides = [1, 1]} : vector<16x128xf32> to vector<16x32xf32>
    %63 = vector.extract_strided_slice %61 {offsets = [0, 0], sizes = [16, 96], strides = [1, 1]} : vector<16x128xf32> to vector<16x96xf32>
    %64 = tpu.concatenate %62, %63 in 1 : vector<16x32xf32>, vector<16x96xf32> -> vector<16x128xf32>
    %65 = arith.addf %64, %56 : vector<16x128xf32>
    %66 = arith.addf %65, %61 : vector<16x128xf32>
    %cst_34 = arith.constant 0.333333343 : f32
    %67 = vector.broadcast %cst_34 : f32 to vector<16x128xf32>
    %68 = arith.mulf %66, %67 : vector<16x128xf32>
    %cst_35 = arith.constant dense<0.000000e+00> : vector<128xf32>
    %69 = vector.multi_reduction <add>, %68, %cst_35 [0] : vector<16x128xf32> to vector<128xf32>
    %70 = vector.shape_cast %69 : vector<128xf32> to vector<1x128xf32>
    %71 = arith.mulf %68, %68 : vector<16x128xf32>
    %cst_36 = arith.constant dense<0.000000e+00> : vector<128xf32>
    %72 = vector.multi_reduction <add>, %71, %cst_36 [0] : vector<16x128xf32> to vector<128xf32>
    %73 = vector.shape_cast %72 : vector<128xf32> to vector<1x128xf32>
    %74 = tpu.concatenate %70, %73 in 0 : vector<1x128xf32>, vector<1x128xf32> -> vector<2x128xf32>
    %75 = vector.extract_strided_slice %74 {offsets = [0, 0], sizes = [2, 32], strides = [1, 1]} : vector<2x128xf32> to vector<2x32xf32>
    %76 = vector.extract_strided_slice %74 {offsets = [0, 32], sizes = [2, 32], strides = [1, 1]} : vector<2x128xf32> to vector<2x32xf32>
    %77 = arith.addf %75, %76 : vector<2x32xf32>
    %78 = vector.extract_strided_slice %74 {offsets = [0, 64], sizes = [2, 32], strides = [1, 1]} : vector<2x128xf32> to vector<2x32xf32>
    %79 = arith.addf %77, %78 : vector<2x32xf32>
    %80 = vector.extract_strided_slice %74 {offsets = [0, 96], sizes = [2, 32], strides = [1, 1]} : vector<2x128xf32> to vector<2x32xf32>
    %81 = arith.addf %79, %80 : vector<2x32xf32>
    %82 = tpu.concatenate %81, %81, %81, %81 in 1 : vector<2x32xf32>, vector<2x32xf32>, vector<2x32xf32>, vector<2x32xf32> -> vector<2x128xf32>
    %83 = vector.extract_strided_slice %82 {offsets = [0, 0], sizes = [1, 128], strides = [1, 1]} : vector<2x128xf32> to vector<1x128xf32>
    %cst_37 = arith.constant 1.562500e-02 : f32
    %84 = vector.broadcast %cst_37 : f32 to vector<1x128xf32>
    %85 = arith.mulf %83, %84 : vector<1x128xf32>
    %86 = vector.extract_strided_slice %82 {offsets = [1, 0], sizes = [1, 128], strides = [1, 1]} : vector<2x128xf32> to vector<1x128xf32>
    %cst_38 = arith.constant 1.562500e-02 : f32
    %87 = vector.broadcast %cst_38 : f32 to vector<1x128xf32>
    %88 = arith.mulf %86, %87 : vector<1x128xf32>
    %89 = arith.mulf %85, %85 : vector<1x128xf32>
    %90 = arith.subf %88, %89 : vector<1x128xf32>
    %cst_39 = arith.constant 9.99999974E-6 : f32
    %91 = vector.broadcast %cst_39 : f32 to vector<1x128xf32>
    %92 = arith.addf %90, %91 : vector<1x128xf32>
    %93 = math.rsqrt %92 : vector<1x128xf32>
    %94 = arith.mulf %3, %93 : vector<1x128xf32>
    %95 = vector.broadcast %94 : vector<1x128xf32> to vector<16x128xf32>
    %96 = arith.mulf %68, %95 : vector<16x128xf32>
    %97 = arith.mulf %85, %94 : vector<1x128xf32>
    %98 = arith.subf %4, %97 : vector<1x128xf32>
    %99 = vector.broadcast %98 : vector<1x128xf32> to vector<16x128xf32>
    %100 = arith.addf %96, %99 : vector<16x128xf32>
    %c1_40 = arith.constant 1 : index
    %c0_41 = arith.constant 0 : index
    %101 = vector.load %arg4[%c1_40, %c0_41] : memref<34x128xf32, #tpu.memory_space<vmem>>, vector<16x128xf32>
    tpu.vector_store %arg4[%c1_40, %c0_41], %100 {strides = array<i32>} : memref<34x128xf32, #tpu.memory_space<vmem>>, vector<16x128xf32>,
    %c17 = arith.constant 17 : index
    %c0_42 = arith.constant 0 : index
    %102 = vector.load %arg4[%c17, %c0_42] : memref<34x128xf32, #tpu.memory_space<vmem>>, vector<1x128xf32>
    tpu.vector_store %arg4[%c17, %c0_42], %0 {strides = array<i32>} : memref<34x128xf32, #tpu.memory_space<vmem>>, vector<1x128xf32>,
    %c1_43 = arith.constant 1 : index
    %c0_44 = arith.constant 0 : index
    %103 = vector.load %arg2[%c1_43, %c0_44] : memref<14x128xf32, #tpu.memory_space<vmem>>, vector<1x128xf32>
    %c5 = arith.constant 5 : index
    %c0_45 = arith.constant 0 : index
    %104 = vector.load %arg2[%c5, %c0_45] : memref<14x128xf32, #tpu.memory_space<vmem>>, vector<1x128xf32>
    %c9 = arith.constant 9 : index
    %c0_46 = arith.constant 0 : index
    %105 = vector.load %arg2[%c9, %c0_46] : memref<14x128xf32, #tpu.memory_space<vmem>>, vector<1x128xf32>
    %106 = tpu.iota {dimensions = array<i32: 0>} : vector<16x1xi32>
    %c7_i32_47 = arith.constant 7 : i32
    %107 = vector.broadcast %c7_i32_47 : i32 to vector<16x1xi32>
    %108 = arith.andi %106, %107 : vector<16x1xi32>
    %c0_i32_48 = arith.constant 0 : i32
    %109 = vector.broadcast %c0_i32_48 : i32 to vector<16x1xi32>
    %110 = arith.cmpi ne, %108, %109 : vector<16x1xi32>
    %c0_49 = arith.constant 0 : index
    %c0_50 = arith.constant 0 : index
    %111 = vector.load %arg4[%c0_49, %c0_50] : memref<34x128xf32, #tpu.memory_space<vmem>>, vector<16x128xf32>
    %cst_51 = arith.constant 0.000000e+00 : f32
    %112 = vector.shape_cast %110 : vector<16x1xi1> to vector<16x1xi1>
    %113 = vector.broadcast %112 : vector<16x1xi1> to vector<16x128xi1>
    %114 = vector.broadcast %cst_51 : f32 to vector<16x128xf32>
    %115 = arith.select %113, %111, %114 : vector<16x128xi1>, vector<16x128xf32>
    %116 = arith.truncf %115 : vector<16x128xf32> to vector<16x128xbf16>
    %c1_52 = arith.constant 1 : index
    %c0_53 = arith.constant 0 : index
    %117 = vector.load %arg4[%c1_52, %c0_53] : memref<34x128xf32, #tpu.memory_space<vmem>>, vector<16x128xf32>
    %118 = arith.truncf %117 : vector<16x128xf32> to vector<16x128xbf16>
    %c7_i32_54 = arith.constant 7 : i32
    %119 = vector.broadcast %c7_i32_54 : i32 to vector<16x1xi32>
    %120 = arith.cmpi ne, %108, %119 : vector<16x1xi32>
    %c2_55 = arith.constant 2 : index
    %c0_56 = arith.constant 0 : index
    %121 = vector.load %arg4[%c2_55, %c0_56] : memref<34x128xf32, #tpu.memory_space<vmem>>, vector<16x128xf32>
    %cst_57 = arith.constant 0.000000e+00 : f32
    %122 = vector.shape_cast %120 : vector<16x1xi1> to vector<16x1xi1>
    %123 = vector.broadcast %122 : vector<16x1xi1> to vector<16x128xi1>
    %124 = vector.broadcast %cst_57 : f32 to vector<16x128xf32>
    %125 = arith.select %123, %121, %124 : vector<16x128xi1>, vector<16x128xf32>
    %126 = arith.truncf %125 : vector<16x128xf32> to vector<16x128xbf16>
    %c3 = arith.constant 3 : index
    %c0_58 = arith.constant 0 : index
    %c0_59 = arith.constant 0 : index
    %127 = vector.load %arg1[%c3, %c0_58, %c0_59] : memref<14x128x128xbf16, #tpu.memory_space<vmem>>, vector<1x128x128xbf16>
    %128 = vector.shape_cast %127 : vector<1x128x128xbf16> to vector<128x128xbf16>
    %cst_60 = arith.constant dense<0.000000e+00> : vector<16x128xf32>
    %129 = tpu.matmul %118, %128, %cst_60 {dimension_numbers = #tpu.dot_dimension_numbers<[1], [0], [0], [1], [0, 0, 1, 1], [], []>} : vector<16x128xbf16>, vector<128x128xbf16>, vector<16x128xf32> -> vector<16x128xf32>
    %c4_61 = arith.constant 4 : index
    %c0_62 = arith.constant 0 : index
    %c0_63 = arith.constant 0 : index
    %130 = vector.load %arg1[%c4_61, %c0_62, %c0_63] : memref<14x128x128xbf16, #tpu.memory_space<vmem>>, vector<1x128x128xbf16>
    %131 = vector.shape_cast %130 : vector<1x128x128xbf16> to vector<128x128xbf16>
    %cst_64 = arith.constant dense<0.000000e+00> : vector<16x128xf32>
    %132 = tpu.matmul %116, %131, %cst_64 {dimension_numbers = #tpu.dot_dimension_numbers<[1], [0], [0], [1], [0, 0, 1, 1], [], []>} : vector<16x128xbf16>, vector<128x128xbf16>, vector<16x128xf32> -> vector<16x128xf32>
    %133 = arith.addf %129, %132 : vector<16x128xf32>
    %c5_65 = arith.constant 5 : index
    %c0_66 = arith.constant 0 : index
    %c0_67 = arith.constant 0 : index
    %134 = vector.load %arg1[%c5_65, %c0_66, %c0_67] : memref<14x128x128xbf16, #tpu.memory_space<vmem>>, vector<1x128x128xbf16>
    %135 = vector.shape_cast %134 : vector<1x128x128xbf16> to vector<128x128xbf16>
    %cst_68 = arith.constant dense<0.000000e+00> : vector<16x128xf32>
    %136 = tpu.matmul %126, %135, %cst_68 {dimension_numbers = #tpu.dot_dimension_numbers<[1], [0], [0], [1], [0, 0, 1, 1], [], []>} : vector<16x128xbf16>, vector<128x128xbf16>, vector<16x128xf32> -> vector<16x128xf32>
    %137 = arith.addf %133, %136 : vector<16x128xf32>
    %138 = vector.broadcast %103 : vector<1x128xf32> to vector<16x128xf32>
    %139 = arith.addf %137, %138 : vector<16x128xf32>
    %c1_69 = arith.constant 1 : index
    %c0_70 = arith.constant 0 : index
    %140 = vector.load %arg4[%c1_69, %c0_70] : memref<34x128xf32, #tpu.memory_space<vmem>>, vector<16x128xf32>
    tpu.vector_store %arg4[%c1_69, %c0_70], %139 {strides = array<i32>} : memref<34x128xf32, #tpu.memory_space<vmem>>, vector<16x128xf32>,
    %c1_71 = arith.constant 1 : index
    %c0_72 = arith.constant 0 : index
    %141 = tpu.strided_load %arg4[%c1_71, %c0_72] {strides = array<i32: 2, 1>} : memref<34x128xf32, #tpu.memory_space<vmem>>, vector<8x128xf32>
    %c2_73 = arith.constant 2 : index
    %c0_74 = arith.constant 0 : index
    %142 = tpu.strided_load %arg4[%c2_73, %c0_74] {strides = array<i32: 2, 1>} : memref<34x128xf32, #tpu.memory_space<vmem>>, vector<8x128xf32>
    %c0_75 = arith.constant 0 : index
    %c0_76 = arith.constant 0 : index
    %143 = tpu.strided_load %arg4[%c0_75, %c0_76] {strides = array<i32: 2, 1>} : memref<34x128xf32, #tpu.memory_space<vmem>>, vector<8x128xf32>
    %144 = tpu.iota {dimensions = array<i32: 0>} : vector<8x1xi32>
    %c3_i32 = arith.constant 3 : i32
    %145 = vector.broadcast %c3_i32 : i32 to vector<8x1xi32>
    %146 = arith.andi %144, %145 : vector<8x1xi32>
    %c0_i32_77 = arith.constant 0 : i32
    %147 = vector.broadcast %c0_i32_77 : i32 to vector<8x1xi32>
    %148 = arith.cmpi ne, %146, %147 : vector<8x1xi32>
    %cst_78 = arith.constant 0.000000e+00 : f32
    %149 = vector.shape_cast %148 : vector<8x1xi1> to vector<8x1xi1>
    %150 = vector.broadcast %149 : vector<8x1xi1> to vector<8x128xi1>
    %151 = vector.broadcast %cst_78 : f32 to vector<8x128xf32>
    %152 = arith.select %150, %143, %151 : vector<8x128xi1>, vector<8x128xf32>
    %153 = vector.extract_strided_slice %141 {offsets = [0, 0], sizes = [8, 32], strides = [1, 1]} : vector<8x128xf32> to vector<8x32xf32>
    %154 = vector.extract_strided_slice %141 {offsets = [0, 64], sizes = [8, 32], strides = [1, 1]} : vector<8x128xf32> to vector<8x32xf32>
    %155 = vector.extract_strided_slice %142 {offsets = [0, 0], sizes = [8, 32], strides = [1, 1]} : vector<8x128xf32> to vector<8x32xf32>
    %156 = vector.extract_strided_slice %142 {offsets = [0, 64], sizes = [8, 32], strides = [1, 1]} : vector<8x128xf32> to vector<8x32xf32>
    %157 = tpu.concatenate %153, %154, %155, %156 in 1 : vector<8x32xf32>, vector<8x32xf32>, vector<8x32xf32>, vector<8x32xf32> -> vector<8x128xf32>
    %158 = vector.extract_strided_slice %141 {offsets = [0, 32], sizes = [8, 32], strides = [1, 1]} : vector<8x128xf32> to vector<8x32xf32>
    %159 = vector.extract_strided_slice %141 {offsets = [0, 96], sizes = [8, 32], strides = [1, 1]} : vector<8x128xf32> to vector<8x32xf32>
    %160 = vector.extract_strided_slice %142 {offsets = [0, 32], sizes = [8, 32], strides = [1, 1]} : vector<8x128xf32> to vector<8x32xf32>
    %161 = vector.extract_strided_slice %142 {offsets = [0, 96], sizes = [8, 32], strides = [1, 1]} : vector<8x128xf32> to vector<8x32xf32>
    %162 = tpu.concatenate %158, %159, %160, %161 in 1 : vector<8x32xf32>, vector<8x32xf32>, vector<8x32xf32>, vector<8x32xf32> -> vector<8x128xf32>
    %163 = vector.extract_strided_slice %152 {offsets = [0, 96], sizes = [8, 32], strides = [1, 1]} : vector<8x128xf32> to vector<8x32xf32>
    %164 = vector.extract_strided_slice %162 {offsets = [0, 0], sizes = [8, 96], strides = [1, 1]} : vector<8x128xf32> to vector<8x96xf32>
    %165 = tpu.concatenate %163, %164 in 1 : vector<8x32xf32>, vector<8x96xf32> -> vector<8x128xf32>
    %166 = arith.addf %165, %157 : vector<8x128xf32>
    %167 = arith.addf %166, %162 : vector<8x128xf32>
    %cst_79 = arith.constant 0.333333343 : f32
    %168 = vector.broadcast %cst_79 : f32 to vector<8x128xf32>
    %169 = arith.mulf %167, %168 : vector<8x128xf32>
    %cst_80 = arith.constant dense<0.000000e+00> : vector<128xf32>
    %170 = vector.multi_reduction <add>, %169, %cst_80 [0] : vector<8x128xf32> to vector<128xf32>
    %171 = vector.shape_cast %170 : vector<128xf32> to vector<1x128xf32>
    %172 = arith.mulf %169, %169 : vector<8x128xf32>
    %cst_81 = arith.constant dense<0.000000e+00> : vector<128xf32>
    %173 = vector.multi_reduction <add>, %172, %cst_81 [0] : vector<8x128xf32> to vector<128xf32>
    %174 = vector.shape_cast %173 : vector<128xf32> to vector<1x128xf32>
    %175 = tpu.concatenate %171, %174 in 0 : vector<1x128xf32>, vector<1x128xf32> -> vector<2x128xf32>
    %176 = vector.extract_strided_slice %175 {offsets = [0, 0], sizes = [2, 32], strides = [1, 1]} : vector<2x128xf32> to vector<2x32xf32>
    %177 = vector.extract_strided_slice %175 {offsets = [0, 32], sizes = [2, 32], strides = [1, 1]} : vector<2x128xf32> to vector<2x32xf32>
    %178 = arith.addf %176, %177 : vector<2x32xf32>
    %179 = vector.extract_strided_slice %175 {offsets = [0, 64], sizes = [2, 32], strides = [1, 1]} : vector<2x128xf32> to vector<2x32xf32>
    %180 = arith.addf %178, %179 : vector<2x32xf32>
    %181 = vector.extract_strided_slice %175 {offsets = [0, 96], sizes = [2, 32], strides = [1, 1]} : vector<2x128xf32> to vector<2x32xf32>
    %182 = arith.addf %180, %181 : vector<2x32xf32>
    %183 = tpu.concatenate %182, %182, %182, %182 in 1 : vector<2x32xf32>, vector<2x32xf32>, vector<2x32xf32>, vector<2x32xf32> -> vector<2x128xf32>
    %184 = vector.extract_strided_slice %183 {offsets = [0, 0], sizes = [1, 128], strides = [1, 1]} : vector<2x128xf32> to vector<1x128xf32>
    %cst_82 = arith.constant 3.125000e-02 : f32
    %185 = vector.broadcast %cst_82 : f32 to vector<1x128xf32>
    %186 = arith.mulf %184, %185 : vector<1x128xf32>
    %187 = vector.extract_strided_slice %183 {offsets = [1, 0], sizes = [1, 128], strides = [1, 1]} : vector<2x128xf32> to vector<1x128xf32>
    %cst_83 = arith.constant 3.125000e-02 : f32
    %188 = vector.broadcast %cst_83 : f32 to vector<1x128xf32>
    %189 = arith.mulf %187, %188 : vector<1x128xf32>
    %190 = arith.mulf %186, %186 : vector<1x128xf32>
    %191 = arith.subf %189, %190 : vector<1x128xf32>
    %cst_84 = arith.constant 9.99999974E-6 : f32
    %192 = vector.broadcast %cst_84 : f32 to vector<1x128xf32>
    %193 = arith.addf %191, %192 : vector<1x128xf32>
    %194 = math.rsqrt %193 : vector<1x128xf32>
    %195 = arith.mulf %104, %194 : vector<1x128xf32>
    %196 = vector.broadcast %195 : vector<1x128xf32> to vector<8x128xf32>
    %197 = arith.mulf %169, %196 : vector<8x128xf32>
    %198 = arith.mulf %186, %195 : vector<1x128xf32>
    %199 = arith.subf %105, %198 : vector<1x128xf32>
    %200 = vector.broadcast %199 : vector<1x128xf32> to vector<8x128xf32>
    %201 = arith.addf %197, %200 : vector<8x128xf32>
    %c1_85 = arith.constant 1 : index
    %c0_86 = arith.constant 0 : index
    %202 = vector.load %arg4[%c1_85, %c0_86] : memref<34x128xf32, #tpu.memory_space<vmem>>, vector<8x128xf32>
    tpu.vector_store %arg4[%c1_85, %c0_86], %201 {strides = array<i32>} : memref<34x128xf32, #tpu.memory_space<vmem>>, vector<8x128xf32>,
    %c9_87 = arith.constant 9 : index
    %c0_88 = arith.constant 0 : index
    %203 = vector.load %arg4[%c9_87, %c0_88] : memref<34x128xf32, #tpu.memory_space<vmem>>, vector<1x128xf32>
    tpu.vector_store %arg4[%c9_87, %c0_88], %0 {strides = array<i32>} : memref<34x128xf32, #tpu.memory_space<vmem>>, vector<1x128xf32>,
    %c2_89 = arith.constant 2 : index
    %c0_90 = arith.constant 0 : index
    %204 = vector.load %arg2[%c2_89, %c0_90] : memref<14x128xf32, #tpu.memory_space<vmem>>, vector<1x128xf32>
    %c6 = arith.constant 6 : index
    %c0_91 = arith.constant 0 : index
    %205 = vector.load %arg2[%c6, %c0_91] : memref<14x128xf32, #tpu.memory_space<vmem>>, vector<1x128xf32>
    %c10 = arith.constant 10 : index
    %c0_92 = arith.constant 0 : index
    %206 = vector.load %arg2[%c10, %c0_92] : memref<14x128xf32, #tpu.memory_space<vmem>>, vector<1x128xf32>
    %207 = tpu.iota {dimensions = array<i32: 0>} : vector<8x1xi32>
    %c3_i32_93 = arith.constant 3 : i32
    %208 = vector.broadcast %c3_i32_93 : i32 to vector<8x1xi32>
    %209 = arith.andi %207, %208 : vector<8x1xi32>
    %c0_i32_94 = arith.constant 0 : i32
    %210 = vector.broadcast %c0_i32_94 : i32 to vector<8x1xi32>
    %211 = arith.cmpi ne, %209, %210 : vector<8x1xi32>
    %c0_95 = arith.constant 0 : index
    %c0_96 = arith.constant 0 : index
    %212 = vector.load %arg4[%c0_95, %c0_96] : memref<34x128xf32, #tpu.memory_space<vmem>>, vector<8x128xf32>
    %cst_97 = arith.constant 0.000000e+00 : f32
    %213 = vector.shape_cast %211 : vector<8x1xi1> to vector<8x1xi1>
    %214 = vector.broadcast %213 : vector<8x1xi1> to vector<8x128xi1>
    %215 = vector.broadcast %cst_97 : f32 to vector<8x128xf32>
    %216 = arith.select %214, %212, %215 : vector<8x128xi1>, vector<8x128xf32>
    %217 = arith.truncf %216 : vector<8x128xf32> to vector<8x128xbf16>
    %c1_98 = arith.constant 1 : index
    %c0_99 = arith.constant 0 : index
    %218 = vector.load %arg4[%c1_98, %c0_99] : memref<34x128xf32, #tpu.memory_space<vmem>>, vector<8x128xf32>
    %219 = arith.truncf %218 : vector<8x128xf32> to vector<8x128xbf16>
    %c3_i32_100 = arith.constant 3 : i32
    %220 = vector.broadcast %c3_i32_100 : i32 to vector<8x1xi32>
    %221 = arith.cmpi ne, %209, %220 : vector<8x1xi32>
    %c2_101 = arith.constant 2 : index
    %c0_102 = arith.constant 0 : index
    %222 = vector.load %arg4[%c2_101, %c0_102] : memref<34x128xf32, #tpu.memory_space<vmem>>, vector<8x128xf32>
    %cst_103 = arith.constant 0.000000e+00 : f32
    %223 = vector.shape_cast %221 : vector<8x1xi1> to vector<8x1xi1>
    %224 = vector.broadcast %223 : vector<8x1xi1> to vector<8x128xi1>
    %225 = vector.broadcast %cst_103 : f32 to vector<8x128xf32>
    %226 = arith.select %224, %222, %225 : vector<8x128xi1>, vector<8x128xf32>
    %227 = arith.truncf %226 : vector<8x128xf32> to vector<8x128xbf16>
    %c6_104 = arith.constant 6 : index
    %c0_105 = arith.constant 0 : index
    %c0_106 = arith.constant 0 : index
    %228 = vector.load %arg1[%c6_104, %c0_105, %c0_106] : memref<14x128x128xbf16, #tpu.memory_space<vmem>>, vector<1x128x128xbf16>
    %229 = vector.shape_cast %228 : vector<1x128x128xbf16> to vector<128x128xbf16>
    %cst_107 = arith.constant dense<0.000000e+00> : vector<8x128xf32>
    %230 = tpu.matmul %219, %229, %cst_107 {dimension_numbers = #tpu.dot_dimension_numbers<[1], [0], [0], [1], [0, 0, 1, 1], [], []>} : vector<8x128xbf16>, vector<128x128xbf16>, vector<8x128xf32> -> vector<8x128xf32>
    %c7 = arith.constant 7 : index
    %c0_108 = arith.constant 0 : index
    %c0_109 = arith.constant 0 : index
    %231 = vector.load %arg1[%c7, %c0_108, %c0_109] : memref<14x128x128xbf16, #tpu.memory_space<vmem>>, vector<1x128x128xbf16>
    %232 = vector.shape_cast %231 : vector<1x128x128xbf16> to vector<128x128xbf16>
    %cst_110 = arith.constant dense<0.000000e+00> : vector<8x128xf32>
    %233 = tpu.matmul %217, %232, %cst_110 {dimension_numbers = #tpu.dot_dimension_numbers<[1], [0], [0], [1], [0, 0, 1, 1], [], []>} : vector<8x128xbf16>, vector<128x128xbf16>, vector<8x128xf32> -> vector<8x128xf32>
    %234 = arith.addf %230, %233 : vector<8x128xf32>
    %c8_111 = arith.constant 8 : index
    %c0_112 = arith.constant 0 : index
    %c0_113 = arith.constant 0 : index
    %235 = vector.load %arg1[%c8_111, %c0_112, %c0_113] : memref<14x128x128xbf16, #tpu.memory_space<vmem>>, vector<1x128x128xbf16>
    %236 = vector.shape_cast %235 : vector<1x128x128xbf16> to vector<128x128xbf16>
    %cst_114 = arith.constant dense<0.000000e+00> : vector<8x128xf32>
    %237 = tpu.matmul %227, %236, %cst_114 {dimension_numbers = #tpu.dot_dimension_numbers<[1], [0], [0], [1], [0, 0, 1, 1], [], []>} : vector<8x128xbf16>, vector<128x128xbf16>, vector<8x128xf32> -> vector<8x128xf32>
    %238 = arith.addf %234, %237 : vector<8x128xf32>
    %239 = vector.broadcast %204 : vector<1x128xf32> to vector<8x128xf32>
    %240 = arith.addf %238, %239 : vector<8x128xf32>
    %c1_115 = arith.constant 1 : index
    %c0_116 = arith.constant 0 : index
    %241 = vector.load %arg4[%c1_115, %c0_116] : memref<34x128xf32, #tpu.memory_space<vmem>>, vector<8x128xf32>
    tpu.vector_store %arg4[%c1_115, %c0_116], %240 {strides = array<i32>} : memref<34x128xf32, #tpu.memory_space<vmem>>, vector<8x128xf32>,
    %c1_117 = arith.constant 1 : index
    %c0_118 = arith.constant 0 : index
    %242 = tpu.strided_load %arg4[%c1_117, %c0_118] {strides = array<i32: 2, 1>} : memref<34x128xf32, #tpu.memory_space<vmem>>, vector<4x128xf32>
    %c2_119 = arith.constant 2 : index
    %c0_120 = arith.constant 0 : index
    %243 = tpu.strided_load %arg4[%c2_119, %c0_120] {strides = array<i32: 2, 1>} : memref<34x128xf32, #tpu.memory_space<vmem>>, vector<4x128xf32>
    %c0_121 = arith.constant 0 : index
    %c0_122 = arith.constant 0 : index
    %244 = tpu.strided_load %arg4[%c0_121, %c0_122] {strides = array<i32: 2, 1>} : memref<34x128xf32, #tpu.memory_space<vmem>>, vector<4x128xf32>
    %245 = tpu.iota {dimensions = array<i32: 0>} : vector<4x1xi32>
    %c1_i32 = arith.constant 1 : i32
    %246 = vector.broadcast %c1_i32 : i32 to vector<4x1xi32>
    %247 = arith.andi %245, %246 : vector<4x1xi32>
    %c0_i32_123 = arith.constant 0 : i32
    %248 = vector.broadcast %c0_i32_123 : i32 to vector<4x1xi32>
    %249 = arith.cmpi ne, %247, %248 : vector<4x1xi32>
    %cst_124 = arith.constant 0.000000e+00 : f32
    %250 = vector.shape_cast %249 : vector<4x1xi1> to vector<4x1xi1>
    %251 = vector.broadcast %250 : vector<4x1xi1> to vector<4x128xi1>
    %252 = vector.broadcast %cst_124 : f32 to vector<4x128xf32>
    %253 = arith.select %251, %244, %252 : vector<4x128xi1>, vector<4x128xf32>
    %254 = vector.extract_strided_slice %242 {offsets = [0, 0], sizes = [4, 32], strides = [1, 1]} : vector<4x128xf32> to vector<4x32xf32>
    %255 = vector.extract_strided_slice %242 {offsets = [0, 64], sizes = [4, 32], strides = [1, 1]} : vector<4x128xf32> to vector<4x32xf32>
    %256 = vector.extract_strided_slice %243 {offsets = [0, 0], sizes = [4, 32], strides = [1, 1]} : vector<4x128xf32> to vector<4x32xf32>
    %257 = vector.extract_strided_slice %243 {offsets = [0, 64], sizes = [4, 32], strides = [1, 1]} : vector<4x128xf32> to vector<4x32xf32>
    %258 = tpu.concatenate %254, %255, %256, %257 in 1 : vector<4x32xf32>, vector<4x32xf32>, vector<4x32xf32>, vector<4x32xf32> -> vector<4x128xf32>
    %259 = vector.extract_strided_slice %242 {offsets = [0, 32], sizes = [4, 32], strides = [1, 1]} : vector<4x128xf32> to vector<4x32xf32>
    %260 = vector.extract_strided_slice %242 {offsets = [0, 96], sizes = [4, 32], strides = [1, 1]} : vector<4x128xf32> to vector<4x32xf32>
    %261 = vector.extract_strided_slice %243 {offsets = [0, 32], sizes = [4, 32], strides = [1, 1]} : vector<4x128xf32> to vector<4x32xf32>
    %262 = vector.extract_strided_slice %243 {offsets = [0, 96], sizes = [4, 32], strides = [1, 1]} : vector<4x128xf32> to vector<4x32xf32>
    %263 = tpu.concatenate %259, %260, %261, %262 in 1 : vector<4x32xf32>, vector<4x32xf32>, vector<4x32xf32>, vector<4x32xf32> -> vector<4x128xf32>
    %264 = vector.extract_strided_slice %253 {offsets = [0, 96], sizes = [4, 32], strides = [1, 1]} : vector<4x128xf32> to vector<4x32xf32>
    %265 = vector.extract_strided_slice %263 {offsets = [0, 0], sizes = [4, 96], strides = [1, 1]} : vector<4x128xf32> to vector<4x96xf32>
    %266 = tpu.concatenate %264, %265 in 1 : vector<4x32xf32>, vector<4x96xf32> -> vector<4x128xf32>
    %267 = arith.addf %266, %258 : vector<4x128xf32>
    %268 = arith.addf %267, %263 : vector<4x128xf32>
    %cst_125 = arith.constant 0.333333343 : f32
    %269 = vector.broadcast %cst_125 : f32 to vector<4x128xf32>
    %270 = arith.mulf %268, %269 : vector<4x128xf32>
    %cst_126 = arith.constant dense<0.000000e+00> : vector<128xf32>
    %271 = vector.multi_reduction <add>, %270, %cst_126 [0] : vector<4x128xf32> to vector<128xf32>
    %272 = vector.shape_cast %271 : vector<128xf32> to vector<1x128xf32>
    %273 = arith.mulf %270, %270 : vector<4x128xf32>
    %cst_127 = arith.constant dense<0.000000e+00> : vector<128xf32>
    %274 = vector.multi_reduction <add>, %273, %cst_127 [0] : vector<4x128xf32> to vector<128xf32>
    %275 = vector.shape_cast %274 : vector<128xf32> to vector<1x128xf32>
    %276 = tpu.concatenate %272, %275 in 0 : vector<1x128xf32>, vector<1x128xf32> -> vector<2x128xf32>
    %277 = vector.extract_strided_slice %276 {offsets = [0, 0], sizes = [2, 32], strides = [1, 1]} : vector<2x128xf32> to vector<2x32xf32>
    %278 = vector.extract_strided_slice %276 {offsets = [0, 32], sizes = [2, 32], strides = [1, 1]} : vector<2x128xf32> to vector<2x32xf32>
    %279 = arith.addf %277, %278 : vector<2x32xf32>
    %280 = vector.extract_strided_slice %276 {offsets = [0, 64], sizes = [2, 32], strides = [1, 1]} : vector<2x128xf32> to vector<2x32xf32>
    %281 = arith.addf %279, %280 : vector<2x32xf32>
    %282 = vector.extract_strided_slice %276 {offsets = [0, 96], sizes = [2, 32], strides = [1, 1]} : vector<2x128xf32> to vector<2x32xf32>
    %283 = arith.addf %281, %282 : vector<2x32xf32>
    %284 = tpu.concatenate %283, %283, %283, %283 in 1 : vector<2x32xf32>, vector<2x32xf32>, vector<2x32xf32>, vector<2x32xf32> -> vector<2x128xf32>
    %285 = vector.extract_strided_slice %284 {offsets = [0, 0], sizes = [1, 128], strides = [1, 1]} : vector<2x128xf32> to vector<1x128xf32>
    %cst_128 = arith.constant 6.250000e-02 : f32
    %286 = vector.broadcast %cst_128 : f32 to vector<1x128xf32>
    %287 = arith.mulf %285, %286 : vector<1x128xf32>
    %288 = vector.extract_strided_slice %284 {offsets = [1, 0], sizes = [1, 128], strides = [1, 1]} : vector<2x128xf32> to vector<1x128xf32>
    %cst_129 = arith.constant 6.250000e-02 : f32
    %289 = vector.broadcast %cst_129 : f32 to vector<1x128xf32>
    %290 = arith.mulf %288, %289 : vector<1x128xf32>
    %291 = arith.mulf %287, %287 : vector<1x128xf32>
    %292 = arith.subf %290, %291 : vector<1x128xf32>
    %cst_130 = arith.constant 9.99999974E-6 : f32
    %293 = vector.broadcast %cst_130 : f32 to vector<1x128xf32>
    %294 = arith.addf %292, %293 : vector<1x128xf32>
    %295 = math.rsqrt %294 : vector<1x128xf32>
    %296 = arith.mulf %205, %295 : vector<1x128xf32>
    %297 = vector.broadcast %296 : vector<1x128xf32> to vector<4x128xf32>
    %298 = arith.mulf %270, %297 : vector<4x128xf32>
    %299 = arith.mulf %287, %296 : vector<1x128xf32>
    %300 = arith.subf %206, %299 : vector<1x128xf32>
    %301 = vector.broadcast %300 : vector<1x128xf32> to vector<4x128xf32>
    %302 = arith.addf %298, %301 : vector<4x128xf32>
    %c1_131 = arith.constant 1 : index
    %c0_132 = arith.constant 0 : index
    %303 = vector.load %arg4[%c1_131, %c0_132] : memref<34x128xf32, #tpu.memory_space<vmem>>, vector<4x128xf32>
    tpu.vector_store %arg4[%c1_131, %c0_132], %302 {strides = array<i32>} : memref<34x128xf32, #tpu.memory_space<vmem>>, vector<4x128xf32>,
    %c5_133 = arith.constant 5 : index
    %c0_134 = arith.constant 0 : index
    %304 = vector.load %arg4[%c5_133, %c0_134] : memref<34x128xf32, #tpu.memory_space<vmem>>, vector<1x128xf32>
    tpu.vector_store %arg4[%c5_133, %c0_134], %0 {strides = array<i32>} : memref<34x128xf32, #tpu.memory_space<vmem>>, vector<1x128xf32>,
    %c3_135 = arith.constant 3 : index
    %c0_136 = arith.constant 0 : index
    %305 = vector.load %arg2[%c3_135, %c0_136] : memref<14x128xf32, #tpu.memory_space<vmem>>, vector<1x128xf32>
    %c7_137 = arith.constant 7 : index
    %c0_138 = arith.constant 0 : index
    %306 = vector.load %arg2[%c7_137, %c0_138] : memref<14x128xf32, #tpu.memory_space<vmem>>, vector<1x128xf32>
    %c11 = arith.constant 11 : index
    %c0_139 = arith.constant 0 : index
    %307 = vector.load %arg2[%c11, %c0_139] : memref<14x128xf32, #tpu.memory_space<vmem>>, vector<1x128xf32>
    %308 = tpu.iota {dimensions = array<i32: 0>} : vector<4x1xi32>
    %c1_i32_140 = arith.constant 1 : i32
    %309 = vector.broadcast %c1_i32_140 : i32 to vector<4x1xi32>
    %310 = arith.andi %308, %309 : vector<4x1xi32>
    %c0_i32_141 = arith.constant 0 : i32
    %311 = vector.broadcast %c0_i32_141 : i32 to vector<4x1xi32>
    %312 = arith.cmpi ne, %310, %311 : vector<4x1xi32>
    %c0_142 = arith.constant 0 : index
    %c0_143 = arith.constant 0 : index
    %313 = vector.load %arg4[%c0_142, %c0_143] : memref<34x128xf32, #tpu.memory_space<vmem>>, vector<4x128xf32>
    %cst_144 = arith.constant 0.000000e+00 : f32
    %314 = vector.shape_cast %312 : vector<4x1xi1> to vector<4x1xi1>
    %315 = vector.broadcast %314 : vector<4x1xi1> to vector<4x128xi1>
    %316 = vector.broadcast %cst_144 : f32 to vector<4x128xf32>
    %317 = arith.select %315, %313, %316 : vector<4x128xi1>, vector<4x128xf32>
    %318 = arith.truncf %317 : vector<4x128xf32> to vector<4x128xbf16>
    %c1_145 = arith.constant 1 : index
    %c0_146 = arith.constant 0 : index
    %319 = vector.load %arg4[%c1_145, %c0_146] : memref<34x128xf32, #tpu.memory_space<vmem>>, vector<4x128xf32>
    %320 = arith.truncf %319 : vector<4x128xf32> to vector<4x128xbf16>
    %c1_i32_147 = arith.constant 1 : i32
    %321 = vector.broadcast %c1_i32_147 : i32 to vector<4x1xi32>
    %322 = arith.cmpi ne, %310, %321 : vector<4x1xi32>
    %c2_148 = arith.constant 2 : index
    %c0_149 = arith.constant 0 : index
    %323 = vector.load %arg4[%c2_148, %c0_149] : memref<34x128xf32, #tpu.memory_space<vmem>>, vector<4x128xf32>
    %cst_150 = arith.constant 0.000000e+00 : f32
    %324 = vector.shape_cast %322 : vector<4x1xi1> to vector<4x1xi1>
    %325 = vector.broadcast %324 : vector<4x1xi1> to vector<4x128xi1>
    %326 = vector.broadcast %cst_150 : f32 to vector<4x128xf32>
    %327 = arith.select %325, %323, %326 : vector<4x128xi1>, vector<4x128xf32>
    %328 = arith.truncf %327 : vector<4x128xf32> to vector<4x128xbf16>
    %c9_151 = arith.constant 9 : index
    %c0_152 = arith.constant 0 : index
    %c0_153 = arith.constant 0 : index
    %329 = vector.load %arg1[%c9_151, %c0_152, %c0_153] : memref<14x128x128xbf16, #tpu.memory_space<vmem>>, vector<1x128x128xbf16>
    %330 = vector.shape_cast %329 : vector<1x128x128xbf16> to vector<128x128xbf16>
    %cst_154 = arith.constant dense<0.000000e+00> : vector<4x128xf32>
    %331 = tpu.matmul %320, %330, %cst_154 {dimension_numbers = #tpu.dot_dimension_numbers<[1], [0], [0], [1], [0, 0, 1, 1], [], []>} : vector<4x128xbf16>, vector<128x128xbf16>, vector<4x128xf32> -> vector<4x128xf32>
    %c10_155 = arith.constant 10 : index
    %c0_156 = arith.constant 0 : index
    %c0_157 = arith.constant 0 : index
    %332 = vector.load %arg1[%c10_155, %c0_156, %c0_157] : memref<14x128x128xbf16, #tpu.memory_space<vmem>>, vector<1x128x128xbf16>
    %333 = vector.shape_cast %332 : vector<1x128x128xbf16> to vector<128x128xbf16>
    %cst_158 = arith.constant dense<0.000000e+00> : vector<4x128xf32>
    %334 = tpu.matmul %318, %333, %cst_158 {dimension_numbers = #tpu.dot_dimension_numbers<[1], [0], [0], [1], [0, 0, 1, 1], [], []>} : vector<4x128xbf16>, vector<128x128xbf16>, vector<4x128xf32> -> vector<4x128xf32>
    %335 = arith.addf %331, %334 : vector<4x128xf32>
    %c11_159 = arith.constant 11 : index
    %c0_160 = arith.constant 0 : index
    %c0_161 = arith.constant 0 : index
    %336 = vector.load %arg1[%c11_159, %c0_160, %c0_161] : memref<14x128x128xbf16, #tpu.memory_space<vmem>>, vector<1x128x128xbf16>
    %337 = vector.shape_cast %336 : vector<1x128x128xbf16> to vector<128x128xbf16>
    %cst_162 = arith.constant dense<0.000000e+00> : vector<4x128xf32>
    %338 = tpu.matmul %328, %337, %cst_162 {dimension_numbers = #tpu.dot_dimension_numbers<[1], [0], [0], [1], [0, 0, 1, 1], [], []>} : vector<4x128xbf16>, vector<128x128xbf16>, vector<4x128xf32> -> vector<4x128xf32>
    %339 = arith.addf %335, %338 : vector<4x128xf32>
    %340 = vector.broadcast %305 : vector<1x128xf32> to vector<4x128xf32>
    %341 = arith.addf %339, %340 : vector<4x128xf32>
    %c1_163 = arith.constant 1 : index
    %c0_164 = arith.constant 0 : index
    %342 = vector.load %arg4[%c1_163, %c0_164] : memref<34x128xf32, #tpu.memory_space<vmem>>, vector<4x128xf32>
    tpu.vector_store %arg4[%c1_163, %c0_164], %341 {strides = array<i32>} : memref<34x128xf32, #tpu.memory_space<vmem>>, vector<4x128xf32>,
    %c1_165 = arith.constant 1 : index
    %c0_166 = arith.constant 0 : index
    %343 = tpu.strided_load %arg4[%c1_165, %c0_166] {strides = array<i32: 2, 1>} : memref<34x128xf32, #tpu.memory_space<vmem>>, vector<2x128xf32>
    %c2_167 = arith.constant 2 : index
    %c0_168 = arith.constant 0 : index
    %344 = tpu.strided_load %arg4[%c2_167, %c0_168] {strides = array<i32: 2, 1>} : memref<34x128xf32, #tpu.memory_space<vmem>>, vector<2x128xf32>
    %c0_169 = arith.constant 0 : index
    %c0_170 = arith.constant 0 : index
    %345 = tpu.strided_load %arg4[%c0_169, %c0_170] {strides = array<i32: 2, 1>} : memref<34x128xf32, #tpu.memory_space<vmem>>, vector<2x128xf32>
    %346 = tpu.iota {dimensions = array<i32: 0>} : vector<2x1xi32>
    %c0_i32_171 = arith.constant 0 : i32
    %347 = vector.broadcast %c0_i32_171 : i32 to vector<2x1xi32>
    %348 = arith.andi %346, %347 : vector<2x1xi32>
    %c0_i32_172 = arith.constant 0 : i32
    %349 = vector.broadcast %c0_i32_172 : i32 to vector<2x1xi32>
    %350 = arith.cmpi ne, %348, %349 : vector<2x1xi32>
    %cst_173 = arith.constant 0.000000e+00 : f32
    %351 = vector.shape_cast %350 : vector<2x1xi1> to vector<2x1xi1>
    %352 = vector.broadcast %351 : vector<2x1xi1> to vector<2x128xi1>
    %353 = vector.broadcast %cst_173 : f32 to vector<2x128xf32>
    %354 = arith.select %352, %345, %353 : vector<2x128xi1>, vector<2x128xf32>
    %355 = vector.extract_strided_slice %343 {offsets = [0, 0], sizes = [2, 32], strides = [1, 1]} : vector<2x128xf32> to vector<2x32xf32>
    %356 = vector.extract_strided_slice %343 {offsets = [0, 64], sizes = [2, 32], strides = [1, 1]} : vector<2x128xf32> to vector<2x32xf32>
    %357 = vector.extract_strided_slice %344 {offsets = [0, 0], sizes = [2, 32], strides = [1, 1]} : vector<2x128xf32> to vector<2x32xf32>
    %358 = vector.extract_strided_slice %344 {offsets = [0, 64], sizes = [2, 32], strides = [1, 1]} : vector<2x128xf32> to vector<2x32xf32>
    %359 = tpu.concatenate %355, %356, %357, %358 in 1 : vector<2x32xf32>, vector<2x32xf32>, vector<2x32xf32>, vector<2x32xf32> -> vector<2x128xf32>
    %360 = vector.extract_strided_slice %343 {offsets = [0, 32], sizes = [2, 32], strides = [1, 1]} : vector<2x128xf32> to vector<2x32xf32>
    %361 = vector.extract_strided_slice %343 {offsets = [0, 96], sizes = [2, 32], strides = [1, 1]} : vector<2x128xf32> to vector<2x32xf32>
    %362 = vector.extract_strided_slice %344 {offsets = [0, 32], sizes = [2, 32], strides = [1, 1]} : vector<2x128xf32> to vector<2x32xf32>
    %363 = vector.extract_strided_slice %344 {offsets = [0, 96], sizes = [2, 32], strides = [1, 1]} : vector<2x128xf32> to vector<2x32xf32>
    %364 = tpu.concatenate %360, %361, %362, %363 in 1 : vector<2x32xf32>, vector<2x32xf32>, vector<2x32xf32>, vector<2x32xf32> -> vector<2x128xf32>
    %365 = vector.extract_strided_slice %354 {offsets = [0, 96], sizes = [2, 32], strides = [1, 1]} : vector<2x128xf32> to vector<2x32xf32>
    %366 = vector.extract_strided_slice %364 {offsets = [0, 0], sizes = [2, 96], strides = [1, 1]} : vector<2x128xf32> to vector<2x96xf32>
    %367 = tpu.concatenate %365, %366 in 1 : vector<2x32xf32>, vector<2x96xf32> -> vector<2x128xf32>
    %368 = arith.addf %367, %359 : vector<2x128xf32>
    %369 = arith.addf %368, %364 : vector<2x128xf32>
    %cst_174 = arith.constant 0.333333343 : f32
    %370 = vector.broadcast %cst_174 : f32 to vector<2x128xf32>
    %371 = arith.mulf %369, %370 : vector<2x128xf32>
    %cst_175 = arith.constant dense<0.000000e+00> : vector<128xf32>
    %372 = vector.multi_reduction <add>, %371, %cst_175 [0] : vector<2x128xf32> to vector<128xf32>
    %373 = vector.shape_cast %372 : vector<128xf32> to vector<1x128xf32>
    %374 = arith.mulf %371, %371 : vector<2x128xf32>
    %cst_176 = arith.constant dense<0.000000e+00> : vector<128xf32>
    %375 = vector.multi_reduction <add>, %374, %cst_176 [0] : vector<2x128xf32> to vector<128xf32>
    %376 = vector.shape_cast %375 : vector<128xf32> to vector<1x128xf32>
    %377 = tpu.concatenate %373, %376 in 0 : vector<1x128xf32>, vector<1x128xf32> -> vector<2x128xf32>
    %378 = vector.extract_strided_slice %377 {offsets = [0, 0], sizes = [2, 32], strides = [1, 1]} : vector<2x128xf32> to vector<2x32xf32>
    %379 = vector.extract_strided_slice %377 {offsets = [0, 32], sizes = [2, 32], strides = [1, 1]} : vector<2x128xf32> to vector<2x32xf32>
    %380 = arith.addf %378, %379 : vector<2x32xf32>
    %381 = vector.extract_strided_slice %377 {offsets = [0, 64], sizes = [2, 32], strides = [1, 1]} : vector<2x128xf32> to vector<2x32xf32>
    %382 = arith.addf %380, %381 : vector<2x32xf32>
    %383 = vector.extract_strided_slice %377 {offsets = [0, 96], sizes = [2, 32], strides = [1, 1]} : vector<2x128xf32> to vector<2x32xf32>
    %384 = arith.addf %382, %383 : vector<2x32xf32>
    %385 = tpu.concatenate %384, %384, %384, %384 in 1 : vector<2x32xf32>, vector<2x32xf32>, vector<2x32xf32>, vector<2x32xf32> -> vector<2x128xf32>
    %386 = vector.extract_strided_slice %385 {offsets = [0, 0], sizes = [1, 128], strides = [1, 1]} : vector<2x128xf32> to vector<1x128xf32>
    %cst_177 = arith.constant 1.250000e-01 : f32
    %387 = vector.broadcast %cst_177 : f32 to vector<1x128xf32>
    %388 = arith.mulf %386, %387 : vector<1x128xf32>
    %389 = vector.extract_strided_slice %385 {offsets = [1, 0], sizes = [1, 128], strides = [1, 1]} : vector<2x128xf32> to vector<1x128xf32>
    %cst_178 = arith.constant 1.250000e-01 : f32
    %390 = vector.broadcast %cst_178 : f32 to vector<1x128xf32>
    %391 = arith.mulf %389, %390 : vector<1x128xf32>
    %392 = arith.mulf %388, %388 : vector<1x128xf32>
    %393 = arith.subf %391, %392 : vector<1x128xf32>
    %cst_179 = arith.constant 9.99999974E-6 : f32
    %394 = vector.broadcast %cst_179 : f32 to vector<1x128xf32>
    %395 = arith.addf %393, %394 : vector<1x128xf32>
    %396 = math.rsqrt %395 : vector<1x128xf32>
    %397 = arith.mulf %306, %396 : vector<1x128xf32>
    %398 = vector.broadcast %397 : vector<1x128xf32> to vector<2x128xf32>
    %399 = arith.mulf %371, %398 : vector<2x128xf32>
    %400 = arith.mulf %388, %397 : vector<1x128xf32>
    %401 = arith.subf %307, %400 : vector<1x128xf32>
    %402 = vector.broadcast %401 : vector<1x128xf32> to vector<2x128xf32>
    %403 = arith.addf %399, %402 : vector<2x128xf32>
    %404 = arith.truncf %403 : vector<2x128xf32> to vector<2x128xbf16>
    %c12 = arith.constant 12 : index
    %c0_180 = arith.constant 0 : index
    %c0_181 = arith.constant 0 : index
    %405 = vector.load %arg1[%c12, %c0_180, %c0_181] : memref<14x128x128xbf16, #tpu.memory_space<vmem>>, vector<1x128x128xbf16>
    %406 = vector.shape_cast %405 : vector<1x128x128xbf16> to vector<128x128xbf16>
    %cst_182 = arith.constant dense<0.000000e+00> : vector<2x128xf32>
    %407 = tpu.matmul %404, %406, %cst_182 {dimension_numbers = #tpu.dot_dimension_numbers<[1], [0], [0], [1], [0, 0, 1, 1], [], []>} : vector<2x128xbf16>, vector<128x128xbf16>, vector<2x128xf32> -> vector<2x128xf32>
    %c12_183 = arith.constant 12 : index
    %c0_184 = arith.constant 0 : index
    %408 = vector.load %arg2[%c12_183, %c0_184] : memref<14x128xf32, #tpu.memory_space<vmem>>, vector<1x128xf32>
    %409 = vector.broadcast %408 : vector<1x128xf32> to vector<2x128xf32>
    %410 = arith.addf %407, %409 : vector<2x128xf32>
    %cst_185 = arith.constant 0.000000e+00 : f32
    %411 = vector.broadcast %cst_185 : f32 to vector<2x128xf32>
    %412 = arith.maximumf %410, %411 : vector<2x128xf32>
    %413 = arith.truncf %412 : vector<2x128xf32> to vector<2x128xbf16>
    %c13 = arith.constant 13 : index
    %c0_186 = arith.constant 0 : index
    %c0_187 = arith.constant 0 : index
    %414 = vector.load %arg1[%c13, %c0_186, %c0_187] : memref<14x128x128xbf16, #tpu.memory_space<vmem>>, vector<1x128x128xbf16>
    %415 = vector.shape_cast %414 : vector<1x128x128xbf16> to vector<128x128xbf16>
    %cst_188 = arith.constant dense<0.000000e+00> : vector<2x128xf32>
    %416 = tpu.matmul %413, %415, %cst_188 {dimension_numbers = #tpu.dot_dimension_numbers<[1], [0], [0], [1], [0, 0, 1, 1], [], []>} : vector<2x128xbf16>, vector<128x128xbf16>, vector<2x128xf32> -> vector<2x128xf32>
    %c13_189 = arith.constant 13 : index
    %c0_190 = arith.constant 0 : index
    %417 = vector.load %arg2[%c13_189, %c0_190] : memref<14x128xf32, #tpu.memory_space<vmem>>, vector<1x128xf32>
    %418 = vector.broadcast %417 : vector<1x128xf32> to vector<2x128xf32>
    %419 = arith.addf %416, %418 : vector<2x128xf32>
    %cst_191 = arith.constant dense<0xFF800000> : vector<2xf32>
    %420 = vector.multi_reduction <maximumf>, %419, %cst_191 [1] : vector<2x128xf32> to vector<2xf32>
    %421 = vector.shape_cast %420 : vector<2xf32> to vector<2x1xf32>
    %422 = vector.broadcast %421 : vector<2x1xf32> to vector<2x128xf32>
    %423 = arith.subf %419, %422 : vector<2x128xf32>
    %424 = math.exp %423 : vector<2x128xf32>
    %cst_192 = arith.constant dense<0.000000e+00> : vector<2xf32>
    %425 = vector.multi_reduction <add>, %424, %cst_192 [1] : vector<2x128xf32> to vector<2xf32>
    %426 = vector.shape_cast %425 : vector<2xf32> to vector<2x1xf32>
    %427 = vector.broadcast %426 : vector<2x1xf32> to vector<2x128xf32>
    %428 = arith.divf %424, %427 : vector<2x128xf32>
    %c0_193 = arith.constant 0 : index
    %c0_194 = arith.constant 0 : index
    %429 = vector.load %arg3[%c0_193, %c0_194] : memref<2x128xf32, #tpu.memory_space<vmem>>, vector<2x128xf32>
    tpu.vector_store %arg3[%c0_193, %c0_194], %428 {strides = array<i32>} : memref<2x128xf32, #tpu.memory_space<vmem>>, vector<2x128xf32>,
    return
  }
}

</mosaic_0001>

<llo_original>
// kernel: tpu_custom_call.1
$region0: #{tpu_custom_call.1}
  #allocation0 [shape = 'u32[]', space=smem, size = 0x4, offset = 0x4, fixed_abs, tag = 'smem constant byte address 0x4 - core index']
  #allocation1 [shape = 'u32[144,128]{1,0:T(1,128)}', space=vmem, size = 0x12000, scoped, tag = 'internal scratch']
  #allocation2 [shape = 'f32[34,128]{1,0:T(8,128)}', space=vmem, size = 0x5000, scoped, tag = 'scratch operand']
  %s0 = inlined_call_operand.hbm [shape: f32[34,128], index: 0, kind: input, shape index: {}]
  %s1 = inlined_call_operand.hbm [shape: bf16[14,128,128], index: 1, kind: input, shape index: {}]
  %s2 = inlined_call_operand.hbm [shape: f32[14,128], index: 2, kind: input, shape index: {}]
  %s3 = inlined_call_operand.hbm [shape: f32[2,128], index: 3, kind: output, shape index: {}]
  %s4 = sld [smem:[#allocation0]]
  $region34: #{tpu_custom_call.1} parent=0
    _
  %s6 = ssub.s32 1, %s4
  %s7 = scalar_select 0, %s6, %s4
  $region1: #{tpu_custom_call.1} parent=0
    #allocation3 [shape = 'u8[20480]{0}', space=vmem, size = 0x5000, scoped, tag = 'input window, operand 0, single buffered']
    #allocation4 [shape = 's32[1]{0}', space=sflag, size = 0x4, scoped, tag = 'scoped memory for tpu_custom_call.1']
    #allocation5 [shape = 's32[1]{0}', space=sflag, size = 0x4, scoped, tag = 'scoped memory for tpu_custom_call.1']
    #allocation6 [shape = 'u8[458752]{0}', space=vmem, size = 0x70000, scoped, tag = 'input window, operand 1, single buffered']
    #allocation7 [shape = 's32[1]{0}', space=sflag, size = 0x4, scoped, tag = 'scoped memory for tpu_custom_call.1']
    #allocation8 [shape = 'u8[8192]{0}', space=vmem, size = 0x2000, scoped, tag = 'input window, operand 2, single buffered']
    #allocation9 [shape = 'u8[1024]{0}', space=vmem, size = 0x400, scoped, tag = 'output window, operand 0, single buffered']
    %8 = vsyncpa [#allocation4], 0
    %9 = vsyncpa [#allocation7], 0
    %10 = vsyncpa [#allocation5], 0
    // Predicated region
    $region2: #{tpu_custom_call.1} parent=1 // pred_check
      _
    $region3: #{tpu_custom_call.1} parent=1 // pred_check_branch
      %12 = sbr.rel (0) target = $region5
    $region4: #{tpu_custom_call.1} parent=1 // pred_region
      %s14 = ssub.s32 640, 640
      %15 = vsyncadd [#allocation4], %s14
      %s16 = sshll.u32 [#allocation3], 4
      %s17 = int_to_ptr.vmem [resolvable:$true] %s16
      %22 = dma.hbm_to_vmem [thread:$0]  %s0, 640, %s17, [#allocation4], 128, 128, 8
    $region5: #{tpu_custom_call.1} parent=1 // pred_fallthru
      _
    // Predicated region
    $region6: #{tpu_custom_call.1} parent=1 // pred_check
      _
    $region7: #{tpu_custom_call.1} parent=1 // pred_check_branch
      %24 = sbr.rel (0) target = $region9
    $region8: #{tpu_custom_call.1} parent=1 // pred_region
      %s26 = ssub.s32 14336, 14336
      %27 = vsyncadd [#allocation7], %s26
      %s28 = sshll.u32 [#allocation6], 4
      %s29 = int_to_ptr.vmem [resolvable:$true] %s28
      %34 = dma.hbm_to_vmem [thread:$0]  %s1, 14336, %s29, [#allocation7], 64, 64, 4
    $region9: #{tpu_custom_call.1} parent=1 // pred_fallthru
      _
    // Predicated region
    $region10: #{tpu_custom_call.1} parent=1 // pred_check
      _
    $region11: #{tpu_custom_call.1} parent=1 // pred_check_branch
      %36 = sbr.rel (0) target = $region13
    $region12: #{tpu_custom_call.1} parent=1 // pred_region
      %s38 = ssub.s32 256, 256
      %39 = vsyncadd [#allocation7], %s38
      %s40 = sshll.u32 [#allocation8], 4
      %s41 = int_to_ptr.vmem [resolvable:$true] %s40
      %46 = dma.hbm_to_vmem [thread:$0]  %s2, 256, %s41, [#allocation7], 128, 128, 8
    $region13: #{tpu_custom_call.1} parent=1 // pred_fallthru
      _
    // Predicated region
    $region14: #{tpu_custom_call.1} parent=1 // pred_check
      _
    $region15: #{tpu_custom_call.1} parent=1 // pred_check_branch
      %48 = sbr.rel (0) target = $region17
    $region16: #{tpu_custom_call.1} parent=1 // pred_region
      %49 = dma.done [#allocation4], 640
    $region17: #{tpu_custom_call.1} parent=1 // pred_fallthru
      _
    // Predicated region
    $region18: #{tpu_custom_call.1} parent=1 // pred_check
      _
    $region19: #{tpu_custom_call.1} parent=1 // pred_check_branch
      %51 = sbr.rel (0) target = $region21
    $region20: #{tpu_custom_call.1} parent=1 // pred_region
      %52 = dma.done [#allocation7], 14336
    $region21: #{tpu_custom_call.1} parent=1 // pred_fallthru
      _
    // Predicated region
    $region22: #{tpu_custom_call.1} parent=1 // pred_check
      _
    $region23: #{tpu_custom_call.1} parent=1 // pred_check_branch
      %54 = sbr.rel (0) target = $region25
    $region24: #{tpu_custom_call.1} parent=1 // pred_region
      %55 = dma.done [#allocation7], 256
    $region25: #{tpu_custom_call.1} parent=1 // pred_fallthru
      _
    %57 = vst [vmem:[#allocation2] sm:$0x1] 0.0
    %v58 = vld [vmem:[#allocation8] sm:$0x1]
    %v59 = vld [vmem:[#allocation8 + $0x4] sm:$0x1]
    %v60 = vld [vmem:[#allocation8 + $0x8] sm:$0x1]
    %v61 = vlaneseq
    %v62 = vshrl.u32 %v61, 7
    %v63 = vadd.s32 %v62, 8
    %v64 = vadd.s32 %v62, 16
    %v65 = vadd.s32 %v62, 24
    %v66 = vand.u32 %v62, 15
    %v67 = vand.u32 %v63, 15
    %v68 = vand.u32 %v64, 15
    %v69 = vand.u32 %v65, 15
    %vm70 = vcmp.ne.s32.totalorder %v66, 0
    %vm71 = vcmp.ne.s32.totalorder %v67, 0
    %vm72 = vcmp.ne.s32.totalorder %v68, 0
    %vm73 = vcmp.ne.s32.totalorder %v69, 0
    %v74 = vld [vmem:[#allocation3] sm:$0xff]
    %v75 = vld [vmem:[#allocation3 + $0x8] sm:$0xff]
    %v76 = vld [vmem:[#allocation3 + $0x10] sm:$0xff]
    %v77 = vld [vmem:[#allocation3 + $0x18] sm:$0xff]
    %v78 = vsel %vm70, 1, 0
    %v79 = vsel %vm71, 1, 0
    %v80 = vsel %vm72, 1, 0
    %v81 = vsel %vm73, 1, 0
    %vm82 = vcmp.eq.s32.totalorder %v78, 1
    %vm83 = vcmp.eq.s32.totalorder %v79, 1
    %vm84 = vcmp.eq.s32.totalorder %v80, 1
    %vm85 = vcmp.eq.s32.totalorder %v81, 1
    %v86 = vsel %vm82, %v74, 0.0
    %v87 = vsel %vm83, %v75, 0.0
    %v88 = vsel %vm84, %v76, 0.0
    %v89 = vsel %vm85, %v77, 0.0
    %v90 = vpack.c.bf16 %v87, %v86
    %v91 = vpack.c.bf16 %v89, %v88
    %v92 = vld [vmem:[#allocation3 + $0x1] sm:$0xff]
    %v93 = vld [vmem:[#allocation3 + $0x9] sm:$0xff]
    %v94 = vld [vmem:[#allocation3 + $0x11] sm:$0xff]
    %v95 = vld [vmem:[#allocation3 + $0x19] sm:$0xff]
    %v96 = vpack.c.bf16 %v93, %v92
    %v97 = vpack.c.bf16 %v95, %v94
    %vm98 = vcmp.ne.s32.totalorder %v66, 15
    %vm99 = vcmp.ne.s32.totalorder %v67, 15
    %vm100 = vcmp.ne.s32.totalorder %v68, 15
    %vm101 = vcmp.ne.s32.totalorder %v69, 15
    %v102 = vld [vmem:[#allocation3 + $0x2] sm:$0xff]
    %v103 = vld [vmem:[#allocation3 + $0xa] sm:$0xff]
    %v104 = vld [vmem:[#allocation3 + $0x12] sm:$0xff]
    %v105 = vld [vmem:[#allocation3 + $0x1a] sm:$0xff]
    %v106 = vsel %vm98, 1, 0
    %v107 = vsel %vm99, 1, 0
    %v108 = vsel %vm100, 1, 0
    %v109 = vsel %vm101, 1, 0
    %vm110 = vcmp.eq.s32.totalorder %v106, 1
    %vm111 = vcmp.eq.s32.totalorder %v107, 1
    %vm112 = vcmp.eq.s32.totalorder %v108, 1
    %vm113 = vcmp.eq.s32.totalorder %v109, 1
    %v114 = vsel %vm110, %v102, 0.0
    %v115 = vsel %vm111, %v103, 0.0
    %v116 = vsel %vm112, %v104, 0.0
    %v117 = vsel %vm113, %v105, 0.0
    %v118 = vpack.c.bf16 %v115, %v114
    %v119 = vpack.c.bf16 %v117, %v116
    %v120 = vld [vmem:[#allocation6] sm:$0xf]
    %v121 = vld [vmem:[#allocation6 + $0x4] sm:$0xf]
    %v122 = vld [vmem:[#allocation6 + $0x8] sm:$0xf]
    %v123 = vld [vmem:[#allocation6 + $0xc] sm:$0xf]
    %v124 = vld [vmem:[#allocation6 + $0x10] sm:$0xf]
    %v125 = vld [vmem:[#allocation6 + $0x14] sm:$0xf]
    %v126 = vld [vmem:[#allocation6 + $0x18] sm:$0xf]
    %v127 = vld [vmem:[#allocation6 + $0x1c] sm:$0xf]
    %v128 = vld [vmem:[#allocation6 + $0x20] sm:$0xf]
    %v129 = vld [vmem:[#allocation6 + $0x24] sm:$0xf]
    %v130 = vld [vmem:[#allocation6 + $0x28] sm:$0xf]
    %v131 = vld [vmem:[#allocation6 + $0x2c] sm:$0xf]
    %v132 = vld [vmem:[#allocation6 + $0x30] sm:$0xf]
    %v133 = vld [vmem:[#allocation6 + $0x34] sm:$0xf]
    %v134 = vld [vmem:[#allocation6 + $0x38] sm:$0xf]
    %v135 = vld [vmem:[#allocation6 + $0x3c] sm:$0xf]
    %s136 = scalar_lea.vmem [#allocation6], 64
    %v137 = vld [vmem:[%s136] sm:$0xf]
    %v138 = vld [vmem:[%s136 + $0x4] sm:$0xf]
    %v139 = vld [vmem:[%s136 + $0x8] sm:$0xf]
    %v140 = vld [vmem:[%s136 + $0xc] sm:$0xf]
    %v141 = vld [vmem:[%s136 + $0x10] sm:$0xf]
    %v142 = vld [vmem:[%s136 + $0x14] sm:$0xf]
    %v143 = vld [vmem:[%s136 + $0x18] sm:$0xf]
    %v144 = vld [vmem:[%s136 + $0x1c] sm:$0xf]
    %v145 = vld [vmem:[%s136 + $0x20] sm:$0xf]
    %v146 = vld [vmem:[%s136 + $0x24] sm:$0xf]
    %v147 = vld [vmem:[%s136 + $0x28] sm:$0xf]
    %v148 = vld [vmem:[%s136 + $0x2c] sm:$0xf]
    %v149 = vld [vmem:[%s136 + $0x30] sm:$0xf]
    %v150 = vld [vmem:[%s136 + $0x34] sm:$0xf]
    %v151 = vld [vmem:[%s136 + $0x38] sm:$0xf]
    %v152 = vld [vmem:[%s136 + $0x3c] sm:$0xf]
    %v169 = vunpack.c.l.b16 %v137
    %v170 = vunpack.c.l.b16 %v138
    %v171 = vunpack.c.l.b16 %v139
    %v172 = vunpack.c.l.b16 %v140
    %v173 = vunpack.c.l.b16 %v141
    %v174 = vunpack.c.l.b16 %v142
    %v175 = vunpack.c.l.b16 %v143
    %v176 = vunpack.c.l.b16 %v144
    %v177 = vunpack.c.l.b16 %v145
    %v178 = vunpack.c.l.b16 %v146
    %v179 = vunpack.c.l.b16 %v147
    %v180 = vunpack.c.l.b16 %v148
    %v181 = vunpack.c.l.b16 %v149
    %v182 = vunpack.c.l.b16 %v150
    %v183 = vunpack.c.l.b16 %v151
    %v184 = vunpack.c.l.b16 %v152
    %v185 = vpack.c.b16 %v170, %v169
    %v186 = vpack.c.b16 %v172, %v171
    %v187 = vpack.c.b16 %v174, %v173
    %v188 = vpack.c.b16 %v176, %v175
    %v189 = vpack.c.b16 %v178, %v177
    %v190 = vpack.c.b16 %v180, %v179
    %v191 = vpack.c.b16 %v182, %v181
    %v192 = vpack.c.b16 %v184, %v183
    %201 = vmatprep.subr.bf16.mxu0 0
    %202 = vmatpush1.bf16.msra.mxu0 %v185
    %203 = vmatprep.subr.bf16.mxu0 0
    %204 = vmatpush1.bf16.msra.mxu0 %v186
    %205 = vmatprep.subr.bf16.mxu0 0
    %206 = vmatpush1.bf16.msra.mxu0 %v187
    %207 = vmatprep.subr.bf16.mxu0 0
    %208 = vmatpush1.bf16.msra.mxu0 %v188
    %209 = vmatprep.subr.bf16.mxu0 0
    %210 = vmatpush1.bf16.msra.mxu0 %v189
    %211 = vmatprep.subr.bf16.mxu0 0
    %212 = vmatpush1.bf16.msra.mxu0 %v190
    %213 = vmatprep.subr.bf16.mxu0 0
    %214 = vmatpush1.bf16.msra.mxu0 %v191
    %215 = vmatprep.subr.bf16.mxu0 0
    %216 = vmatpush1.bf16.msra.mxu0 %v192
    %217 = vmatprep.subr.bf16.mxu0 0
    %218 = vmatpush1.bf16.msra.mxu0 0
    %219 = vmatprep.subr.bf16.mxu0 0
    %220 = vmatpush1.bf16.msra.mxu0 0
    %221 = vmatprep.subr.bf16.mxu0 0
    %222 = vmatpush1.bf16.msra.mxu0 0
    %223 = vmatprep.subr.bf16.mxu0 0
    %224 = vmatpush1.bf16.msra.mxu0 0
    %225 = vmatprep.subr.bf16.mxu0 0
    %226 = vmatpush1.bf16.msra.mxu0 0
    %227 = vmatprep.subr.bf16.mxu0 0
    %228 = vmatpush1.bf16.msra.mxu0 0
    %229 = vmatprep.subr.bf16.mxu0 0
    %230 = vmatpush1.bf16.msra.mxu0 0
    %231 = vmatprep.subr.bf16.mxu0 0
    %232 = vmatpush1.bf16.msra.mxu0 0
    %233 = vmatprep.mubr.bf16.mxu0 0
    %234 = vmatmul.mubr.bf16.gmra.mrb[0].mxu0 %v90
    %v235 = vpop.f32.mrb[0].mxu0
    %v236 = vadd.f32 0.0, %v235
    %v237 = vpop.f32.mrb[0].mxu0
    %v238 = vpop.f32.mrb[0].mxu0
    %v239 = vadd.f32 0.0, %v238
    %v240 = vpop.f32.mrb[0].mxu0
    %241 = vmatprep.mubr.bf16.mxu0 0
    %242 = vmatmul.mubr.bf16.gmra.mrb[0].mxu0 %v91
    %v243 = vpop.f32.mrb[0].mxu0
    %v244 = vadd.f32 0.0, %v243
    %v245 = vpop.f32.mrb[0].mxu0
    %v246 = vpop.f32.mrb[0].mxu0
    %v247 = vadd.f32 0.0, %v246
    %v248 = vpop.f32.mrb[0].mxu0
    %249 = vdwg.mxu0
    %v266 = vunpack.c.l.b16 %v120
    %v267 = vunpack.c.l.b16 %v121
    %v268 = vunpack.c.l.b16 %v122
    %v269 = vunpack.c.l.b16 %v123
    %v270 = vunpack.c.l.b16 %v124
    %v271 = vunpack.c.l.b16 %v125
    %v272 = vunpack.c.l.b16 %v126
    %v273 = vunpack.c.l.b16 %v127
    %v274 = vunpack.c.l.b16 %v128
    %v275 = vunpack.c.l.b16 %v129
    %v276 = vunpack.c.l.b16 %v130
    %v277 = vunpack.c.l.b16 %v131
    %v278 = vunpack.c.l.b16 %v132
    %v279 = vunpack.c.l.b16 %v133
    %v280 = vunpack.c.l.b16 %v134
    %v281 = vunpack.c.l.b16 %v135
    %v282 = vpack.c.b16 %v267, %v266
    %v283 = vpack.c.b16 %v269, %v268
    %v284 = vpack.c.b16 %v271, %v270
    %v285 = vpack.c.b16 %v273, %v272
    %v286 = vpack.c.b16 %v275, %v274
    %v287 = vpack.c.b16 %v277, %v276
    %v288 = vpack.c.b16 %v279, %v278
    %v289 = vpack.c.b16 %v281, %v280
    %298 = vmatprep.subr.bf16.mxu0 0
    %299 = vmatpush1.bf16.msra.mxu0 %v282
    %300 = vmatprep.subr.bf16.mxu0 0
    %301 = vmatpush1.bf16.msra.mxu0 %v283
    %302 = vmatprep.subr.bf16.mxu0 0
    %303 = vmatpush1.bf16.msra.mxu0 %v284
    %304 = vmatprep.subr.bf16.mxu0 0
    %305 = vmatpush1.bf16.msra.mxu0 %v285
    %306 = vmatprep.subr.bf16.mxu0 0
    %307 = vmatpush1.bf16.msra.mxu0 %v286
    %308 = vmatprep.subr.bf16.mxu0 0
    %309 = vmatpush1.bf16.msra.mxu0 %v287
    %310 = vmatprep.subr.bf16.mxu0 0
    %311 = vmatpush1.bf16.msra.mxu0 %v288
    %312 = vmatprep.subr.bf16.mxu0 0
    %313 = vmatpush1.bf16.msra.mxu0 %v289
    %314 = vmatprep.subr.bf16.mxu0 0
    %315 = vmatpush1.bf16.msra.mxu0 0
    %316 = vmatprep.subr.bf16.mxu0 0
    %317 = vmatpush1.bf16.msra.mxu0 0
    %318 = vmatprep.subr.bf16.mxu0 0
    %319 = vmatpush1.bf16.msra.mxu0 0
    %320 = vmatprep.subr.bf16.mxu0 0
    %321 = vmatpush1.bf16.msra.mxu0 0
    %322 = vmatprep.subr.bf16.mxu0 0
    %323 = vmatpush1.bf16.msra.mxu0 0
    %324 = vmatprep.subr.bf16.mxu0 0
    %325 = vmatpush1.bf16.msra.mxu0 0
    %326 = vmatprep.subr.bf16.mxu0 0
    %327 = vmatpush1.bf16.msra.mxu0 0
    %328 = vmatprep.subr.bf16.mxu0 0
    %329 = vmatpush1.bf16.msra.mxu0 0
    %330 = vmatprep.mubr.bf16.mxu0 0
    %331 = vmatmul.mubr.bf16.gmra.mrb[0].mxu0 %v96
    %v332 = vpop.f32.mrb[0].mxu0
    %v333 = vadd.f32 %v236, %v332
    %v334 = vpop.f32.mrb[0].mxu0
    %v335 = vpop.f32.mrb[0].mxu0
    %v336 = vadd.f32 %v239, %v335
    %v337 = vpop.f32.mrb[0].mxu0
    %338 = vmatprep.mubr.bf16.mxu0 0
    %339 = vmatmul.mubr.bf16.gmra.mrb[0].mxu0 %v97
    %v340 = vpop.f32.mrb[0].mxu0
    %v341 = vadd.f32 %v244, %v340
    %v342 = vpop.f32.mrb[0].mxu0
    %v343 = vpop.f32.mrb[0].mxu0
    %v344 = vadd.f32 %v247, %v343
    %v345 = vpop.f32.mrb[0].mxu0
    %346 = vdwg.mxu0
    %s347 = scalar_lea.vmem [#allocation6], 128
    %v348 = vld [vmem:[%s347] sm:$0xf]
    %v349 = vld [vmem:[%s347 + $0x4] sm:$0xf]
    %v350 = vld [vmem:[%s347 + $0x8] sm:$0xf]
    %v351 = vld [vmem:[%s347 + $0xc] sm:$0xf]
    %v352 = vld [vmem:[%s347 + $0x10] sm:$0xf]
    %v353 = vld [vmem:[%s347 + $0x14] sm:$0xf]
    %v354 = vld [vmem:[%s347 + $0x18] sm:$0xf]
    %v355 = vld [vmem:[%s347 + $0x1c] sm:$0xf]
    %v356 = vld [vmem:[%s347 + $0x20] sm:$0xf]
    %v357 = vld [vmem:[%s347 + $0x24] sm:$0xf]
    %v358 = vld [vmem:[%s347 + $0x28] sm:$0xf]
    %v359 = vld [vmem:[%s347 + $0x2c] sm:$0xf]
    %v360 = vld [vmem:[%s347 + $0x30] sm:$0xf]
    %v361 = vld [vmem:[%s347 + $0x34] sm:$0xf]
    %v362 = vld [vmem:[%s347 + $0x38] sm:$0xf]
    %v363 = vld [vmem:[%s347 + $0x3c] sm:$0xf]
    %v380 = vunpack.c.l.b16 %v348
    %v381 = vunpack.c.l.b16 %v349
    %v382 = vunpack.c.l.b16 %v350
    %v383 = vunpack.c.l.b16 %v351
    %v384 = vunpack.c.l.b16 %v352
    %v385 = vunpack.c.l.b16 %v353
    %v386 = vunpack.c.l.b16 %v354
    %v387 = vunpack.c.l.b16 %v355
    %v388 = vunpack.c.l.b16 %v356
    %v389 = vunpack.c.l.b16 %v357
    %v390 = vunpack.c.l.b16 %v358
    %v391 = vunpack.c.l.b16 %v359
    %v392 = vunpack.c.l.b16 %v360
    %v393 = vunpack.c.l.b16 %v361
    %v394 = vunpack.c.l.b16 %v362
    %v395 = vunpack.c.l.b16 %v363
    %v396 = vpack.c.b16 %v381, %v380
    %v397 = vpack.c.b16 %v383, %v382
    %v398 = vpack.c.b16 %v385, %v384
    %v399 = vpack.c.b16 %v387, %v386
    %v400 = vpack.c.b16 %v389, %v388
    %v401 = vpack.c.b16 %v391, %v390
    %v402 = vpack.c.b16 %v393, %v392
    %v403 = vpack.c.b16 %v395, %v394
    %412 = vmatprep.subr.bf16.mxu0 0
    %413 = vmatpush1.bf16.msra.mxu0 %v396
    %414 = vmatprep.subr.bf16.mxu0 0
    %415 = vmatpush1.bf16.msra.mxu0 %v397
    %416 = vmatprep.subr.bf16.mxu0 0
    %417 = vmatpush1.bf16.msra.mxu0 %v398
    %418 = vmatprep.subr.bf16.mxu0 0
    %419 = vmatpush1.bf16.msra.mxu0 %v399
    %420 = vmatprep.subr.bf16.mxu0 0
    %421 = vmatpush1.bf16.msra.mxu0 %v400
    %422 = vmatprep.subr.bf16.mxu0 0
    %423 = vmatpush1.bf16.msra.mxu0 %v401
    %424 = vmatprep.subr.bf16.mxu0 0
    %425 = vmatpush1.bf16.msra.mxu0 %v402
    %426 = vmatprep.subr.bf16.mxu0 0
    %427 = vmatpush1.bf16.msra.mxu0 %v403
    %428 = vmatprep.subr.bf16.mxu0 0
    %429 = vmatpush1.bf16.msra.mxu0 0
    %430 = vmatprep.subr.bf16.mxu0 0
    %431 = vmatpush1.bf16.msra.mxu0 0
    %432 = vmatprep.subr.bf16.mxu0 0
    %433 = vmatpush1.bf16.msra.mxu0 0
    %434 = vmatprep.subr.bf16.mxu0 0
    %435 = vmatpush1.bf16.msra.mxu0 0
    %436 = vmatprep.subr.bf16.mxu0 0
    %437 = vmatpush1.bf16.msra.mxu0 0
    %438 = vmatprep.subr.bf16.mxu0 0
    %439 = vmatpush1.bf16.msra.mxu0 0
    %440 = vmatprep.subr.bf16.mxu0 0
    %441 = vmatpush1.bf16.msra.mxu0 0
    %442 = vmatprep.subr.bf16.mxu0 0
    %443 = vmatpush1.bf16.msra.mxu0 0
    %444 = vmatprep.mubr.bf16.mxu0 0
    %445 = vmatmul.mubr.bf16.gmra.mrb[0].mxu0 %v118
    %v446 = vpop.f32.mrb[0].mxu0
    %v447 = vadd.f32 0.0, %v446
    %v448 = vpop.f32.mrb[0].mxu0
    %v449 = vpop.f32.mrb[0].mxu0
    %v450 = vadd.f32 0.0, %v449
    %v451 = vpop.f32.mrb[0].mxu0
    %452 = vmatprep.mubr.bf16.mxu0 0
    %453 = vmatmul.mubr.bf16.gmra.mrb[0].mxu0 %v119
    %v454 = vpop.f32.mrb[0].mxu0
    %v455 = vadd.f32 0.0, %v454
    %v456 = vpop.f32.mrb[0].mxu0
    %v457 = vpop.f32.mrb[0].mxu0
    %v458 = vadd.f32 0.0, %v457
    %v459 = vpop.f32.mrb[0].mxu0
    %460 = vdwg.mxu0
    %v461 = vadd.f32 %v333, %v447
    %v462 = vadd.f32 %v336, %v450
    %v463 = vadd.f32 %v341, %v455
    %v464 = vadd.f32 %v344, %v458
    %v465 = vlaneseq
    %v466 = vshrl.u32 %v465, 7
    %v467 = vsub.s32 0, %v466
    %v468 = vrot.slane %v58, %v467
    %v469 = vadd.f32 %v461, %v468
    %v470 = vadd.f32 %v462, %v468
    %v471 = vadd.f32 %v463, %v468
    %v472 = vadd.f32 %v464, %v468
    %473 = vst [vmem:[#allocation2 + $0x1] sm:$0xff] %v469
    %474 = vst [vmem:[#allocation2 + $0x9] sm:$0xff] %v470
    %475 = vst [vmem:[#allocation2 + $0x11] sm:$0xff] %v471
    %476 = vst [vmem:[#allocation2 + $0x19] sm:$0xff] %v472
    %s477 = scalar_lea.vmem [#allocation2], 1
    %v478 = vld [vmem:[%s477] ss:$2 sm:$0xff]
    %s479 = scalar_lea.vmem [#allocation2], 17
    %v480 = vld [vmem:[%s479] ss:$2 sm:$0xff]
    %s481 = scalar_lea.vmem [#allocation2], 2
    %v482 = vld [vmem:[%s481] ss:$2 sm:$0xff]
    %s483 = scalar_lea.vmem [#allocation2], 18
    %v484 = vld [vmem:[%s483] ss:$2 sm:$0xff]
    %v485 = vld [vmem:[#allocation2] ss:$2 sm:$0xff]
    %s486 = scalar_lea.vmem [#allocation2], 16
    %v487 = vld [vmem:[%s486] ss:$2 sm:$0xff]
    %v488 = vand.u32 %v62, 7
    %v489 = vand.u32 %v63, 7
    %vm490 = vcmp.ne.s32.totalorder %v488, 0
    %vm491 = vcmp.ne.s32.totalorder %v489, 0
    %v492 = vsel %vm490, 1, 0
    %v493 = vsel %vm491, 1, 0
    %vm494 = vcmp.eq.s32.totalorder %v492, 1
    %vm495 = vcmp.eq.s32.totalorder %v493, 1
    %v496 = vsel %vm494, %v485, 0.0
    %v497 = vsel %vm495, %v487, 0.0
    %500 = vrot.lane.b32.xlu0 %v478, 96
    %v501 = vpop.permute.xlu0 %500
    %502 = vrot.lane.b32.xlu0 %v480, 96
    %v503 = vpop.permute.xlu0 %502
    %508 = vrot.lane.b32.xlu0 %v482, 64
    %v509 = vpop.permute.xlu0 %508
    %510 = vrot.lane.b32.xlu0 %v484, 64
    %v511 = vpop.permute.xlu0 %510
    %514 = vrot.lane.b32.xlu0 %v482, 32
    %v515 = vpop.permute.xlu0 %514
    %516 = vrot.lane.b32.xlu0 %v484, 32
    %v517 = vpop.permute.xlu0 %516
    %vm520 = vcmask 261120
    %v521 = vsel %vm520, %v478, %v501
    %v522 = vsel %vm520, %v480, %v503
    %vm523 = vcmask 523264
    %v524 = vsel %vm523, %v521, %v509
    %v525 = vsel %vm523, %v522, %v511
    %vm526 = vcmask 785408
    %v527 = vsel %vm526, %v524, %v515
    %v528 = vsel %vm526, %v525, %v517
    %529 = vrot.lane.b32.xlu0 %v478, 64
    %v530 = vpop.permute.xlu0 %529
    %531 = vrot.lane.b32.xlu0 %v480, 64
    %v532 = vpop.permute.xlu0 %531
    %v535 = vsel %vm520, %v501, %v530
    %v536 = vsel %vm520, %v503, %v532
    %v537 = vsel %vm523, %v535, %v515
    %v538 = vsel %vm523, %v536, %v517
    %v539 = vsel %vm526, %v537, %v482
    %v540 = vsel %vm526, %v538, %v484
    %543 = vrot.lane.b32.xlu0 %v496, 32
    %v544 = vpop.permute.xlu0 %543
    %545 = vrot.lane.b32.xlu0 %v497, 32
    %v546 = vpop.permute.xlu0 %545
    %551 = vrot.lane.b32.xlu0 %v539, 32
    %v552 = vpop.permute.xlu0 %551
    %553 = vrot.lane.b32.xlu0 %v540, 32
    %v554 = vpop.permute.xlu0 %553
    %v557 = vsel %vm520, %v544, %v552
    %v558 = vsel %vm520, %v546, %v554
    %v559 = vadd.f32 %v557, %v527
    %v560 = vadd.f32 %v558, %v528
    %v561 = vadd.f32 %v559, %v539
    %v562 = vadd.f32 %v560, %v540
    %v563 = vmul.f32 %v561, 0.33333334
    %v564 = vmul.f32 %v562, 0.33333334
    %v565 = vadd.f32 %v563, %v564
    %v566 = vrot.slane %v565, 4
    %v567 = vadd.f32 %v565, %v566
    %v568 = vrot.slane %v567, 2
    %v569 = vadd.f32 %v567, %v568
    %v570 = vrot.slane %v569, 1
    %v571 = vadd.f32 %v569, %v570
    %v572 = vmul.f32 %v563, %v563
    %v573 = vmul.f32 %v564, %v564
    %v574 = vadd.f32 %v572, %v573
    %v575 = vrot.slane %v574, 4
    %v576 = vadd.f32 %v574, %v575
    %v577 = vrot.slane %v576, 2
    %v578 = vadd.f32 %v576, %v577
    %v579 = vrot.slane %v578, 1
    %v580 = vadd.f32 %v578, %v579
    %vm581 = vcmask 1040384
    %v582 = vsel %vm581, %v571, %v580
    %584 = vrot.lane.b32.xlu0 %v582, 96
    %v585 = vpop.permute.xlu0 %584
    %v587 = vadd.f32 %v582, %v585
    %588 = vrot.lane.b32.xlu0 %v582, 64
    %v589 = vpop.permute.xlu0 %588
    %v591 = vadd.f32 %v587, %v589
    %592 = vrot.lane.b32.xlu0 %v582, 32
    %v593 = vpop.permute.xlu0 %592
    %v595 = vadd.f32 %v591, %v593
    %597 = vrot.lane.b32.xlu0 %v595, 32
    %v598 = vpop.permute.xlu0 %597
    %600 = vrot.lane.b32.xlu0 %v595, 64
    %v601 = vpop.permute.xlu0 %600
    %603 = vrot.lane.b32.xlu0 %v595, 96
    %v604 = vpop.permute.xlu0 %603
    %v606 = vsel %vm520, %v595, %v598
    %v607 = vsel %vm523, %v606, %v601
    %v608 = vsel %vm526, %v607, %v604
    %v609 = vmul.f32 %v608, 0.015625
    %v610 = vmul.f32 %v609, %v609
    %v612 = vrot.slane %v610, 7
    %v614 = vsub.f32 %v609, %v612
    %v615 = vadd.f32 %v614, 1e-05
    %v616 = vrsqrt.pop %v615
    %v618 = vrot.slane %v616, 1
    %v620 = vmul.f32 %v59, %v618
    %v621 = vlaneseq
    %v622 = vshrl.u32 %v621, 7
    %v623 = vsub.s32 0, %v622
    %v624 = vrot.slane %v620, %v623
    %v625 = vmul.f32 %v563, %v624
    %v626 = vmul.f32 %v564, %v624
    %v627 = vmul.f32 %v609, %v620
    %v628 = vsub.f32 %v60, %v627
    %v629 = vlaneseq
    %v630 = vshrl.u32 %v629, 7
    %v631 = vsub.s32 0, %v630
    %v632 = vrot.slane %v628, %v631
    %v633 = vadd.f32 %v625, %v632
    %v634 = vadd.f32 %v626, %v632
    %635 = vst [vmem:[#allocation2 + $0x1] sm:$0xff] %v633
    %636 = vst [vmem:[#allocation2 + $0x9] sm:$0xff] %v634
    %637 = vst [vmem:[#allocation2 + $0x11] sm:$0x1] 0.0
    %v638 = vld [vmem:[#allocation8 + $0x1] sm:$0x1]
    %v639 = vld [vmem:[#allocation8 + $0x5] sm:$0x1]
    %v640 = vld [vmem:[#allocation8 + $0x9] sm:$0x1]
    %v641 = vld [vmem:[#allocation2] sm:$0xff]
    %v642 = vld [vmem:[#allocation2 + $0x8] sm:$0xff]
    %v643 = vsel %vm494, %v641, 0.0
    %v644 = vsel %vm495, %v642, 0.0
    %v645 = vpack.c.bf16 %v644, %v643
    %v646 = vld [vmem:[#allocation2 + $0x1] sm:$0xff]
    %v647 = vld [vmem:[#allocation2 + $0x9] sm:$0xff]
    %v648 = vpack.c.bf16 %v647, %v646
    %vm649 = vcmp.ne.s32.totalorder %v488, 7
    %vm650 = vcmp.ne.s32.totalorder %v489, 7
    %v651 = vld [vmem:[#allocation2 + $0x2] sm:$0xff]
    %v652 = vld [vmem:[#allocation2 + $0xa] sm:$0xff]
    %v653 = vsel %vm649, 1, 0
    %v654 = vsel %vm650, 1, 0
    %vm655 = vcmp.eq.s32.totalorder %v653, 1
    %vm656 = vcmp.eq.s32.totalorder %v654, 1
    %v657 = vsel %vm655, %v651, 0.0
    %v658 = vsel %vm656, %v652, 0.0
    %v659 = vpack.c.bf16 %v658, %v657
    %s660 = scalar_lea.vmem [#allocation6], 192
    %v661 = vld [vmem:[%s660] sm:$0xf]
    %v662 = vld [vmem:[%s660 + $0x4] sm:$0xf]
    %v663 = vld [vmem:[%s660 + $0x8] sm:$0xf]
    %v664 = vld [vmem:[%s660 + $0xc] sm:$0xf]
    %v665 = vld [vmem:[%s660 + $0x10] sm:$0xf]
    %v666 = vld [vmem:[%s660 + $0x14] sm:$0xf]
    %v667 = vld [vmem:[%s660 + $0x18] sm:$0xf]
    %v668 = vld [vmem:[%s660 + $0x1c] sm:$0xf]
    %v669 = vld [vmem:[%s660 + $0x20] sm:$0xf]
    %v670 = vld [vmem:[%s660 + $0x24] sm:$0xf]
    %v671 = vld [vmem:[%s660 + $0x28] sm:$0xf]
    %v672 = vld [vmem:[%s660 + $0x2c] sm:$0xf]
    %v673 = vld [vmem:[%s660 + $0x30] sm:$0xf]
    %v674 = vld [vmem:[%s660 + $0x34] sm:$0xf]
    %v675 = vld [vmem:[%s660 + $0x38] sm:$0xf]
    %v676 = vld [vmem:[%s660 + $0x3c] sm:$0xf]
    %s677 = scalar_lea.vmem [#allocation6], 256
    %v678 = vld [vmem:[%s677] sm:$0xf]
    %v679 = vld [vmem:[%s677 + $0x4] sm:$0xf]
    %v680 = vld [vmem:[%s677 + $0x8] sm:$0xf]
    %v681 = vld [vmem:[%s677 + $0xc] sm:$0xf]
    %v682 = vld [vmem:[%s677 + $0x10] sm:$0xf]
    %v683 = vld [vmem:[%s677 + $0x14] sm:$0xf]
    %v684 = vld [vmem:[%s677 + $0x18] sm:$0xf]
    %v685 = vld [vmem:[%s677 + $0x1c] sm:$0xf]
    %v686 = vld [vmem:[%s677 + $0x20] sm:$0xf]
    %v687 = vld [vmem:[%s677 + $0x24] sm:$0xf]
    %v688 = vld [vmem:[%s677 + $0x28] sm:$0xf]
    %v689 = vld [vmem:[%s677 + $0x2c] sm:$0xf]
    %v690 = vld [vmem:[%s677 + $0x30] sm:$0xf]
    %v691 = vld [vmem:[%s677 + $0x34] sm:$0xf]
    %v692 = vld [vmem:[%s677 + $0x38] sm:$0xf]
    %v693 = vld [vmem:[%s677 + $0x3c] sm:$0xf]
    %v710 = vunpack.c.l.b16 %v678
    %v711 = vunpack.c.l.b16 %v679
    %v712 = vunpack.c.l.b16 %v680
    %v713 = vunpack.c.l.b16 %v681
    %v714 = vunpack.c.l.b16 %v682
    %v715 = vunpack.c.l.b16 %v683
    %v716 = vunpack.c.l.b16 %v684
    %v717 = vunpack.c.l.b16 %v685
    %v718 = vunpack.c.l.b16 %v686
    %v719 = vunpack.c.l.b16 %v687
    %v720 = vunpack.c.l.b16 %v688
    %v721 = vunpack.c.l.b16 %v689
    %v722 = vunpack.c.l.b16 %v690
    %v723 = vunpack.c.l.b16 %v691
    %v724 = vunpack.c.l.b16 %v692
    %v725 = vunpack.c.l.b16 %v693
    %v726 = vpack.c.b16 %v711, %v710
    %v727 = vpack.c.b16 %v713, %v712
    %v728 = vpack.c.b16 %v715, %v714
    %v729 = vpack.c.b16 %v717, %v716
    %v730 = vpack.c.b16 %v719, %v718
    %v731 = vpack.c.b16 %v721, %v720
    %v732 = vpack.c.b16 %v723, %v722
    %v733 = vpack.c.b16 %v725, %v724
    %742 = vmatprep.subr.bf16.mxu0 0
    %743 = vmatpush1.bf16.msra.mxu0 %v726
    %744 = vmatprep.subr.bf16.mxu0 0
    %745 = vmatpush1.bf16.msra.mxu0 %v727
    %746 = vmatprep.subr.bf16.mxu0 0
    %747 = vmatpush1.bf16.msra.mxu0 %v728
    %748 = vmatprep.subr.bf16.mxu0 0
    %749 = vmatpush1.bf16.msra.mxu0 %v729
    %750 = vmatprep.subr.bf16.mxu0 0
    %751 = vmatpush1.bf16.msra.mxu0 %v730
    %752 = vmatprep.subr.bf16.mxu0 0
    %753 = vmatpush1.bf16.msra.mxu0 %v731
    %754 = vmatprep.subr.bf16.mxu0 0
    %755 = vmatpush1.bf16.msra.mxu0 %v732
    %756 = vmatprep.subr.bf16.mxu0 0
    %757 = vmatpush1.bf16.msra.mxu0 %v733
    %758 = vmatprep.subr.bf16.mxu0 0
    %759 = vmatpush1.bf16.msra.mxu0 0
    %760 = vmatprep.subr.bf16.mxu0 0
    %761 = vmatpush1.bf16.msra.mxu0 0
    %762 = vmatprep.subr.bf16.mxu0 0
    %763 = vmatpush1.bf16.msra.mxu0 0
    %764 = vmatprep.subr.bf16.mxu0 0
    %765 = vmatpush1.bf16.msra.mxu0 0
    %766 = vmatprep.subr.bf16.mxu0 0
    %767 = vmatpush1.bf16.msra.mxu0 0
    %768 = vmatprep.subr.bf16.mxu0 0
    %769 = vmatpush1.bf16.msra.mxu0 0
    %770 = vmatprep.subr.bf16.mxu0 0
    %771 = vmatpush1.bf16.msra.mxu0 0
    %772 = vmatprep.subr.bf16.mxu0 0
    %773 = vmatpush1.bf16.msra.mxu0 0
    %774 = vmatprep.mubr.bf16.mxu0 0
    %775 = vmatmul.mubr.bf16.gmra.mrb[0].mxu0 %v645
    %v776 = vpop.f32.mrb[0].mxu0
    %v777 = vadd.f32 0.0, %v776
    %v778 = vpop.f32.mrb[0].mxu0
    %v779 = vpop.f32.mrb[0].mxu0
    %v780 = vadd.f32 0.0, %v779
    %v781 = vpop.f32.mrb[0].mxu0
    %782 = vdwg.mxu0
    %v799 = vunpack.c.l.b16 %v661
    %v800 = vunpack.c.l.b16 %v662
    %v801 = vunpack.c.l.b16 %v663
    %v802 = vunpack.c.l.b16 %v664
    %v803 = vunpack.c.l.b16 %v665
    %v804 = vunpack.c.l.b16 %v666
    %v805 = vunpack.c.l.b16 %v667
    %v806 = vunpack.c.l.b16 %v668
    %v807 = vunpack.c.l.b16 %v669
    %v808 = vunpack.c.l.b16 %v670
    %v809 = vunpack.c.l.b16 %v671
    %v810 = vunpack.c.l.b16 %v672
    %v811 = vunpack.c.l.b16 %v673
    %v812 = vunpack.c.l.b16 %v674
    %v813 = vunpack.c.l.b16 %v675
    %v814 = vunpack.c.l.b16 %v676
    %v815 = vpack.c.b16 %v800, %v799
    %v816 = vpack.c.b16 %v802, %v801
    %v817 = vpack.c.b16 %v804, %v803
    %v818 = vpack.c.b16 %v806, %v805
    %v819 = vpack.c.b16 %v808, %v807
    %v820 = vpack.c.b16 %v810, %v809
    %v821 = vpack.c.b16 %v812, %v811
    %v822 = vpack.c.b16 %v814, %v813
    %831 = vmatprep.subr.bf16.mxu0 0
    %832 = vmatpush1.bf16.msra.mxu0 %v815
    %833 = vmatprep.subr.bf16.mxu0 0
    %834 = vmatpush1.bf16.msra.mxu0 %v816
    %835 = vmatprep.subr.bf16.mxu0 0
    %836 = vmatpush1.bf16.msra.mxu0 %v817
    %837 = vmatprep.subr.bf16.mxu0 0
    %838 = vmatpush1.bf16.msra.mxu0 %v818
    %839 = vmatprep.subr.bf16.mxu0 0
    %840 = vmatpush1.bf16.msra.mxu0 %v819
    %841 = vmatprep.subr.bf16.mxu0 0
    %842 = vmatpush1.bf16.msra.mxu0 %v820
    %843 = vmatprep.subr.bf16.mxu0 0
    %844 = vmatpush1.bf16.msra.mxu0 %v821
    %845 = vmatprep.subr.bf16.mxu0 0
    %846 = vmatpush1.bf16.msra.mxu0 %v822
    %847 = vmatprep.subr.bf16.mxu0 0
    %848 = vmatpush1.bf16.msra.mxu0 0
    %849 = vmatprep.subr.bf16.mxu0 0
    %850 = vmatpush1.bf16.msra.mxu0 0
    %851 = vmatprep.subr.bf16.mxu0 0
    %852 = vmatpush1.bf16.msra.mxu0 0
    %853 = vmatprep.subr.bf16.mxu0 0
    %854 = vmatpush1.bf16.msra.mxu0 0
    %855 = vmatprep.subr.bf16.mxu0 0
    %856 = vmatpush1.bf16.msra.mxu0 0
    %857 = vmatprep.subr.bf16.mxu0 0
    %858 = vmatpush1.bf16.msra.mxu0 0
    %859 = vmatprep.subr.bf16.mxu0 0
    %860 = vmatpush1.bf16.msra.mxu0 0
    %861 = vmatprep.subr.bf16.mxu0 0
    %862 = vmatpush1.bf16.msra.mxu0 0
    %863 = vmatprep.mubr.bf16.mxu0 0
    %864 = vmatmul.mubr.bf16.gmra.mrb[0].mxu0 %v648
    %v865 = vpop.f32.mrb[0].mxu0
    %v866 = vadd.f32 %v777, %v865
    %v867 = vpop.f32.mrb[0].mxu0
    %v868 = vpop.f32.mrb[0].mxu0
    %v869 = vadd.f32 %v780, %v868
    %v870 = vpop.f32.mrb[0].mxu0
    %871 = vdwg.mxu0
    %s872 = scalar_lea.vmem [#allocation6], 320
    %v873 = vld [vmem:[%s872] sm:$0xf]
    %v874 = vld [vmem:[%s872 + $0x4] sm:$0xf]
    %v875 = vld [vmem:[%s872 + $0x8] sm:$0xf]
    %v876 = vld [vmem:[%s872 + $0xc] sm:$0xf]
    %v877 = vld [vmem:[%s872 + $0x10] sm:$0xf]
    %v878 = vld [vmem:[%s872 + $0x14] sm:$0xf]
    %v879 = vld [vmem:[%s872 + $0x18] sm:$0xf]
    %v880 = vld [vmem:[%s872 + $0x1c] sm:$0xf]
    %v881 = vld [vmem:[%s872 + $0x20] sm:$0xf]
    %v882 = vld [vmem:[%s872 + $0x24] sm:$0xf]
    %v883 = vld [vmem:[%s872 + $0x28] sm:$0xf]
    %v884 = vld [vmem:[%s872 + $0x2c] sm:$0xf]
    %v885 = vld [vmem:[%s872 + $0x30] sm:$0xf]
    %v886 = vld [vmem:[%s872 + $0x34] sm:$0xf]
    %v887 = vld [vmem:[%s872 + $0x38] sm:$0xf]
    %v888 = vld [vmem:[%s872 + $0x3c] sm:$0xf]
    %v905 = vunpack.c.l.b16 %v873
    %v906 = vunpack.c.l.b16 %v874
    %v907 = vunpack.c.l.b16 %v875
    %v908 = vunpack.c.l.b16 %v876
    %v909 = vunpack.c.l.b16 %v877
    %v910 = vunpack.c.l.b16 %v878
    %v911 = vunpack.c.l.b16 %v879
    %v912 = vunpack.c.l.b16 %v880
    %v913 = vunpack.c.l.b16 %v881
    %v914 = vunpack.c.l.b16 %v882
    %v915 = vunpack.c.l.b16 %v883
    %v916 = vunpack.c.l.b16 %v884
    %v917 = vunpack.c.l.b16 %v885
    %v918 = vunpack.c.l.b16 %v886
    %v919 = vunpack.c.l.b16 %v887
    %v920 = vunpack.c.l.b16 %v888
    %v921 = vpack.c.b16 %v906, %v905
    %v922 = vpack.c.b16 %v908, %v907
    %v923 = vpack.c.b16 %v910, %v909
    %v924 = vpack.c.b16 %v912, %v911
    %v925 = vpack.c.b16 %v914, %v913
    %v926 = vpack.c.b16 %v916, %v915
    %v927 = vpack.c.b16 %v918, %v917
    %v928 = vpack.c.b16 %v920, %v919
    %937 = vmatprep.subr.bf16.mxu0 0
    %938 = vmatpush1.bf16.msra.mxu0 %v921
    %939 = vmatprep.subr.bf16.mxu0 0
    %940 = vmatpush1.bf16.msra.mxu0 %v922
    %941 = vmatprep.subr.bf16.mxu0 0
    %942 = vmatpush1.bf16.msra.mxu0 %v923
    %943 = vmatprep.subr.bf16.mxu0 0
    %944 = vmatpush1.bf16.msra.mxu0 %v924
    %945 = vmatprep.subr.bf16.mxu0 0
    %946 = vmatpush1.bf16.msra.mxu0 %v925
    %947 = vmatprep.subr.bf16.mxu0 0
    %948 = vmatpush1.bf16.msra.mxu0 %v926
    %949 = vmatprep.subr.bf16.mxu0 0
    %950 = vmatpush1.bf16.msra.mxu0 %v927
    %951 = vmatprep.subr.bf16.mxu0 0
    %952 = vmatpush1.bf16.msra.mxu0 %v928
    %953 = vmatprep.subr.bf16.mxu0 0
    %954 = vmatpush1.bf16.msra.mxu0 0
    %955 = vmatprep.subr.bf16.mxu0 0
    %956 = vmatpush1.bf16.msra.mxu0 0
    %957 = vmatprep.subr.bf16.mxu0 0
    %958 = vmatpush1.bf16.msra.mxu0 0
    %959 = vmatprep.subr.bf16.mxu0 0
    %960 = vmatpush1.bf16.msra.mxu0 0
    %961 = vmatprep.subr.bf16.mxu0 0
    %962 = vmatpush1.bf16.msra.mxu0 0
    %963 = vmatprep.subr.bf16.mxu0 0
    %964 = vmatpush1.bf16.msra.mxu0 0
    %965 = vmatprep.subr.bf16.mxu0 0
    %966 = vmatpush1.bf16.msra.mxu0 0
    %967 = vmatprep.subr.bf16.mxu0 0
    %968 = vmatpush1.bf16.msra.mxu0 0
    %969 = vmatprep.mubr.bf16.mxu0 0
    %970 = vmatmul.mubr.bf16.gmra.mrb[0].mxu0 %v659
    %v971 = vpop.f32.mrb[0].mxu0
    %v972 = vadd.f32 0.0, %v971
    %v973 = vpop.f32.mrb[0].mxu0
    %v974 = vpop.f32.mrb[0].mxu0
    %v975 = vadd.f32 0.0, %v974
    %v976 = vpop.f32.mrb[0].mxu0
    %977 = vdwg.mxu0
    %v978 = vadd.f32 %v866, %v972
    %v979 = vadd.f32 %v869, %v975
    %v980 = vlaneseq
    %v981 = vshrl.u32 %v980, 7
    %v982 = vsub.s32 0, %v981
    %v983 = vrot.slane %v638, %v982
    %v984 = vadd.f32 %v978, %v983
    %v985 = vadd.f32 %v979, %v983
    %986 = vst [vmem:[#allocation2 + $0x1] sm:$0xff] %v984
    %987 = vst [vmem:[#allocation2 + $0x9] sm:$0xff] %v985
    %v988 = vld [vmem:[%s477] ss:$2 sm:$0xff]
    %s989 = scalar_lea.vmem [#allocation2], 2
    %v990 = vld [vmem:[%s989] ss:$2 sm:$0xff]
    %v991 = vld [vmem:[#allocation2] ss:$2 sm:$0xff]
    %v992 = vand.u32 %v62, 3
    %vm993 = vcmp.ne.s32.totalorder %v992, 0
    %v994 = vsel %vm993, 1, 0
    %vm995 = vcmp.eq.s32.totalorder %v994, 1
    %v996 = vsel %vm995, %v991, 0.0
    %998 = vrot.lane.b32.xlu0 %v988, 96
    %v999 = vpop.permute.xlu0 %998
    %1002 = vrot.lane.b32.xlu0 %v990, 64
    %v1003 = vpop.permute.xlu0 %1002
    %1005 = vrot.lane.b32.xlu0 %v990, 32
    %v1006 = vpop.permute.xlu0 %1005
    %v1008 = vsel %vm520, %v988, %v999
    %v1009 = vsel %vm523, %v1008, %v1003
    %v1010 = vsel %vm526, %v1009, %v1006
    %1011 = vrot.lane.b32.xlu0 %v988, 64
    %v1012 = vpop.permute.xlu0 %1011
    %v1014 = vsel %vm520, %v999, %v1012
    %v1015 = vsel %vm523, %v1014, %v1006
    %v1016 = vsel %vm526, %v1015, %v990
    %1018 = vrot.lane.b32.xlu0 %v996, 32
    %v1019 = vpop.permute.xlu0 %1018
    %1022 = vrot.lane.b32.xlu0 %v1016, 32
    %v1023 = vpop.permute.xlu0 %1022
    %v1025 = vsel %vm520, %v1019, %v1023
    %v1026 = vadd.f32 %v1025, %v1010
    %v1027 = vadd.f32 %v1026, %v1016
    %v1028 = vmul.f32 %v1027, 0.33333334
    %v1029 = vrot.slane %v1028, 4
    %v1030 = vadd.f32 %v1028, %v1029
    %v1031 = vrot.slane %v1030, 2
    %v1032 = vadd.f32 %v1030, %v1031
    %v1033 = vrot.slane %v1032, 1
    %v1034 = vadd.f32 %v1032, %v1033
    %v1035 = vmul.f32 %v1028, %v1028
    %v1036 = vrot.slane %v1035, 4
    %v1037 = vadd.f32 %v1035, %v1036
    %v1038 = vrot.slane %v1037, 2
    %v1039 = vadd.f32 %v1037, %v1038
    %v1040 = vrot.slane %v1039, 1
    %v1041 = vadd.f32 %v1039, %v1040
    %v1042 = vsel %vm581, %v1034, %v1041
    %1044 = vrot.lane.b32.xlu0 %v1042, 96
    %v1045 = vpop.permute.xlu0 %1044
    %v1047 = vadd.f32 %v1042, %v1045
    %1048 = vrot.lane.b32.xlu0 %v1042, 64
    %v1049 = vpop.permute.xlu0 %1048
    %v1051 = vadd.f32 %v1047, %v1049
    %1052 = vrot.lane.b32.xlu0 %v1042, 32
    %v1053 = vpop.permute.xlu0 %1052
    %v1055 = vadd.f32 %v1051, %v1053
    %1057 = vrot.lane.b32.xlu0 %v1055, 32
    %v1058 = vpop.permute.xlu0 %1057
    %1060 = vrot.lane.b32.xlu0 %v1055, 64
    %v1061 = vpop.permute.xlu0 %1060
    %1063 = vrot.lane.b32.xlu0 %v1055, 96
    %v1064 = vpop.permute.xlu0 %1063
    %v1066 = vsel %vm520, %v1055, %v1058
    %v1067 = vsel %vm523, %v1066, %v1061
    %v1068 = vsel %vm526, %v1067, %v1064
    %v1069 = vmul.f32 %v1068, 0.03125
    %v1070 = vmul.f32 %v1069, %v1069
    %v1072 = vrot.slane %v1070, 7
    %v1074 = vsub.f32 %v1069, %v1072
    %v1075 = vadd.f32 %v1074, 1e-05
    %v1076 = vrsqrt.pop %v1075
    %v1078 = vrot.slane %v1076, 1
    %v1080 = vmul.f32 %v639, %v1078
    %v1081 = vlaneseq
    %v1082 = vshrl.u32 %v1081, 7
    %v1083 = vsub.s32 0, %v1082
    %v1084 = vrot.slane %v1080, %v1083
    %v1085 = vmul.f32 %v1028, %v1084
    %v1086 = vmul.f32 %v1069, %v1080
    %v1087 = vsub.f32 %v640, %v1086
    %v1088 = vlaneseq
    %v1089 = vshrl.u32 %v1088, 7
    %v1090 = vsub.s32 0, %v1089
    %v1091 = vrot.slane %v1087, %v1090
    %v1092 = vadd.f32 %v1085, %v1091
    %1093 = vst [vmem:[#allocation2 + $0x1] sm:$0xff] %v1092
    %1094 = vst [vmem:[#allocation2 + $0x9] sm:$0x1] 0.0
    %v1095 = vld [vmem:[#allocation8 + $0x2] sm:$0x1]
    %v1096 = vld [vmem:[#allocation8 + $0x6] sm:$0x1]
    %v1097 = vld [vmem:[#allocation8 + $0xa] sm:$0x1]
    %v1098 = vld [vmem:[#allocation2] sm:$0xff]
    %v1099 = vsel %vm995, %v1098, 0.0
    %v1100 = vpack.c.bf16 %v1099, %v1099
    %v1101 = vld [vmem:[#allocation2 + $0x1] sm:$0xff]
    %v1102 = vpack.c.bf16 %v1101, %v1101
    %vm1103 = vcmp.ne.s32.totalorder %v992, 3
    %v1104 = vld [vmem:[#allocation2 + $0x2] sm:$0xff]
    %v1105 = vsel %vm1103, 1, 0
    %vm1106 = vcmp.eq.s32.totalorder %v1105, 1
    %v1107 = vsel %vm1106, %v1104, 0.0
    %v1108 = vpack.c.bf16 %v1107, %v1107
    %s1109 = scalar_lea.vmem [#allocation6], 384
    %v1110 = vld [vmem:[%s1109] sm:$0xf]
    %v1111 = vld [vmem:[%s1109 + $0x4] sm:$0xf]
    %v1112 = vld [vmem:[%s1109 + $0x8] sm:$0xf]
    %v1113 = vld [vmem:[%s1109 + $0xc] sm:$0xf]
    %v1114 = vld [vmem:[%s1109 + $0x10] sm:$0xf]
    %v1115 = vld [vmem:[%s1109 + $0x14] sm:$0xf]
    %v1116 = vld [vmem:[%s1109 + $0x18] sm:$0xf]
    %v1117 = vld [vmem:[%s1109 + $0x1c] sm:$0xf]
    %v1118 = vld [vmem:[%s1109 + $0x20] sm:$0xf]
    %v1119 = vld [vmem:[%s1109 + $0x24] sm:$0xf]
    %v1120 = vld [vmem:[%s1109 + $0x28] sm:$0xf]
    %v1121 = vld [vmem:[%s1109 + $0x2c] sm:$0xf]
    %v1122 = vld [vmem:[%s1109 + $0x30] sm:$0xf]
    %v1123 = vld [vmem:[%s1109 + $0x34] sm:$0xf]
    %v1124 = vld [vmem:[%s1109 + $0x38] sm:$0xf]
    %v1125 = vld [vmem:[%s1109 + $0x3c] sm:$0xf]
    %s1126 = scalar_lea.vmem [#allocation6], 448
    %v1127 = vld [vmem:[%s1126] sm:$0xf]
    %v1128 = vld [vmem:[%s1126 + $0x4] sm:$0xf]
    %v1129 = vld [vmem:[%s1126 + $0x8] sm:$0xf]
    %v1130 = vld [vmem:[%s1126 + $0xc] sm:$0xf]
    %v1131 = vld [vmem:[%s1126 + $0x10] sm:$0xf]
    %v1132 = vld [vmem:[%s1126 + $0x14] sm:$0xf]
    %v1133 = vld [vmem:[%s1126 + $0x18] sm:$0xf]
    %v1134 = vld [vmem:[%s1126 + $0x1c] sm:$0xf]
    %v1135 = vld [vmem:[%s1126 + $0x20] sm:$0xf]
    %v1136 = vld [vmem:[%s1126 + $0x24] sm:$0xf]
    %v1137 = vld [vmem:[%s1126 + $0x28] sm:$0xf]
    %v1138 = vld [vmem:[%s1126 + $0x2c] sm:$0xf]
    %v1139 = vld [vmem:[%s1126 + $0x30] sm:$0xf]
    %v1140 = vld [vmem:[%s1126 + $0x34] sm:$0xf]
    %v1141 = vld [vmem:[%s1126 + $0x38] sm:$0xf]
    %v1142 = vld [vmem:[%s1126 + $0x3c] sm:$0xf]
    %v1159 = vunpack.c.l.b16 %v1127
    %v1160 = vunpack.c.l.b16 %v1128
    %v1161 = vunpack.c.l.b16 %v1129
    %v1162 = vunpack.c.l.b16 %v1130
    %v1163 = vunpack.c.l.b16 %v1131
    %v1164 = vunpack.c.l.b16 %v1132
    %v1165 = vunpack.c.l.b16 %v1133
    %v1166 = vunpack.c.l.b16 %v1134
    %v1167 = vunpack.c.l.b16 %v1135
    %v1168 = vunpack.c.l.b16 %v1136
    %v1169 = vunpack.c.l.b16 %v1137
    %v1170 = vunpack.c.l.b16 %v1138
    %v1171 = vunpack.c.l.b16 %v1139
    %v1172 = vunpack.c.l.b16 %v1140
    %v1173 = vunpack.c.l.b16 %v1141
    %v1174 = vunpack.c.l.b16 %v1142
    %v1175 = vpack.c.b16 %v1160, %v1159
    %v1176 = vpack.c.b16 %v1162, %v1161
    %v1177 = vpack.c.b16 %v1164, %v1163
    %v1178 = vpack.c.b16 %v1166, %v1165
    %v1179 = vpack.c.b16 %v1168, %v1167
    %v1180 = vpack.c.b16 %v1170, %v1169
    %v1181 = vpack.c.b16 %v1172, %v1171
    %v1182 = vpack.c.b16 %v1174, %v1173
    %1191 = vmatprep.subr.bf16.mxu0 0
    %1192 = vmatpush1.bf16.msra.mxu0 %v1175
    %1193 = vmatprep.subr.bf16.mxu0 0
    %1194 = vmatpush1.bf16.msra.mxu0 %v1176
    %1195 = vmatprep.subr.bf16.mxu0 0
    %1196 = vmatpush1.bf16.msra.mxu0 %v1177
    %1197 = vmatprep.subr.bf16.mxu0 0
    %1198 = vmatpush1.bf16.msra.mxu0 %v1178
    %1199 = vmatprep.subr.bf16.mxu0 0
    %1200 = vmatpush1.bf16.msra.mxu0 %v1179
    %1201 = vmatprep.subr.bf16.mxu0 0
    %1202 = vmatpush1.bf16.msra.mxu0 %v1180
    %1203 = vmatprep.subr.bf16.mxu0 0
    %1204 = vmatpush1.bf16.msra.mxu0 %v1181
    %1205 = vmatprep.subr.bf16.mxu0 0
    %1206 = vmatpush1.bf16.msra.mxu0 %v1182
    %1207 = vmatprep.subr.bf16.mxu0 0
    %1208 = vmatpush1.bf16.msra.mxu0 0
    %1209 = vmatprep.subr.bf16.mxu0 0
    %1210 = vmatpush1.bf16.msra.mxu0 0
    %1211 = vmatprep.subr.bf16.mxu0 0
    %1212 = vmatpush1.bf16.msra.mxu0 0
    %1213 = vmatprep.subr.bf16.mxu0 0
    %1214 = vmatpush1.bf16.msra.mxu0 0
    %1215 = vmatprep.subr.bf16.mxu0 0
    %1216 = vmatpush1.bf16.msra.mxu0 0
    %1217 = vmatprep.subr.bf16.mxu0 0
    %1218 = vmatpush1.bf16.msra.mxu0 0
    %1219 = vmatprep.subr.bf16.mxu0 0
    %1220 = vmatpush1.bf16.msra.mxu0 0
    %1221 = vmatprep.subr.bf16.mxu0 0
    %1222 = vmatpush1.bf16.msra.mxu0 0
    %1223 = vmatprep.mubr.bf16.mxu0 0
    %1224 = vmatmul.mubr.bf16.gmra.mrb[0].mxu0 %v1100
    %v1225 = vpop.f32.mrb[0].mxu0
    %v1226 = vadd.f32 0.0, %v1225
    %v1227 = vpop.f32.mrb[0].mxu0
    %v1228 = vpop.f32.mrb[0].mxu0
    %v1229 = vpop.f32.mrb[0].mxu0
    %1230 = vdwg.mxu0
    %v1247 = vunpack.c.l.b16 %v1110
    %v1248 = vunpack.c.l.b16 %v1111
    %v1249 = vunpack.c.l.b16 %v1112
    %v1250 = vunpack.c.l.b16 %v1113
    %v1251 = vunpack.c.l.b16 %v1114
    %v1252 = vunpack.c.l.b16 %v1115
    %v1253 = vunpack.c.l.b16 %v1116
    %v1254 = vunpack.c.l.b16 %v1117
    %v1255 = vunpack.c.l.b16 %v1118
    %v1256 = vunpack.c.l.b16 %v1119
    %v1257 = vunpack.c.l.b16 %v1120
    %v1258 = vunpack.c.l.b16 %v1121
    %v1259 = vunpack.c.l.b16 %v1122
    %v1260 = vunpack.c.l.b16 %v1123
    %v1261 = vunpack.c.l.b16 %v1124
    %v1262 = vunpack.c.l.b16 %v1125
    %v1263 = vpack.c.b16 %v1248, %v1247
    %v1264 = vpack.c.b16 %v1250, %v1249
    %v1265 = vpack.c.b16 %v1252, %v1251
    %v1266 = vpack.c.b16 %v1254, %v1253
    %v1267 = vpack.c.b16 %v1256, %v1255
    %v1268 = vpack.c.b16 %v1258, %v1257
    %v1269 = vpack.c.b16 %v1260, %v1259
    %v1270 = vpack.c.b16 %v1262, %v1261
    %1279 = vmatprep.subr.bf16.mxu0 0
    %1280 = vmatpush1.bf16.msra.mxu0 %v1263
    %1281 = vmatprep.subr.bf16.mxu0 0
    %1282 = vmatpush1.bf16.msra.mxu0 %v1264
    %1283 = vmatprep.subr.bf16.mxu0 0
    %1284 = vmatpush1.bf16.msra.mxu0 %v1265
    %1285 = vmatprep.subr.bf16.mxu0 0
    %1286 = vmatpush1.bf16.msra.mxu0 %v1266
    %1287 = vmatprep.subr.bf16.mxu0 0
    %1288 = vmatpush1.bf16.msra.mxu0 %v1267
    %1289 = vmatprep.subr.bf16.mxu0 0
    %1290 = vmatpush1.bf16.msra.mxu0 %v1268
    %1291 = vmatprep.subr.bf16.mxu0 0
    %1292 = vmatpush1.bf16.msra.mxu0 %v1269
    %1293 = vmatprep.subr.bf16.mxu0 0
    %1294 = vmatpush1.bf16.msra.mxu0 %v1270
    %1295 = vmatprep.subr.bf16.mxu0 0
    %1296 = vmatpush1.bf16.msra.mxu0 0
    %1297 = vmatprep.subr.bf16.mxu0 0
    %1298 = vmatpush1.bf16.msra.mxu0 0
    %1299 = vmatprep.subr.bf16.mxu0 0
    %1300 = vmatpush1.bf16.msra.mxu0 0
    %1301 = vmatprep.subr.bf16.mxu0 0
    %1302 = vmatpush1.bf16.msra.mxu0 0
    %1303 = vmatprep.subr.bf16.mxu0 0
    %1304 = vmatpush1.bf16.msra.mxu0 0
    %1305 = vmatprep.subr.bf16.mxu0 0
    %1306 = vmatpush1.bf16.msra.mxu0 0
    %1307 = vmatprep.subr.bf16.mxu0 0
    %1308 = vmatpush1.bf16.msra.mxu0 0
    %1309 = vmatprep.subr.bf16.mxu0 0
    %1310 = vmatpush1.bf16.msra.mxu0 0
    %1311 = vmatprep.mubr.bf16.mxu0 0
    %1312 = vmatmul.mubr.bf16.gmra.mrb[0].mxu0 %v1102
    %v1313 = vpop.f32.mrb[0].mxu0
    %v1314 = vadd.f32 %v1226, %v1313
    %v1315 = vpop.f32.mrb[0].mxu0
    %v1316 = vpop.f32.mrb[0].mxu0
    %v1317 = vpop.f32.mrb[0].mxu0
    %1318 = vdwg.mxu0
    %s1319 = scalar_lea.vmem [#allocation6], 512
    %v1320 = vld [vmem:[%s1319] sm:$0xf]
    %v1321 = vld [vmem:[%s1319 + $0x4] sm:$0xf]
    %v1322 = vld [vmem:[%s1319 + $0x8] sm:$0xf]
    %v1323 = vld [vmem:[%s1319 + $0xc] sm:$0xf]
    %v1324 = vld [vmem:[%s1319 + $0x10] sm:$0xf]
    %v1325 = vld [vmem:[%s1319 + $0x14] sm:$0xf]
    %v1326 = vld [vmem:[%s1319 + $0x18] sm:$0xf]
    %v1327 = vld [vmem:[%s1319 + $0x1c] sm:$0xf]
    %v1328 = vld [vmem:[%s1319 + $0x20] sm:$0xf]
    %v1329 = vld [vmem:[%s1319 + $0x24] sm:$0xf]
    %v1330 = vld [vmem:[%s1319 + $0x28] sm:$0xf]
    %v1331 = vld [vmem:[%s1319 + $0x2c] sm:$0xf]
    %v1332 = vld [vmem:[%s1319 + $0x30] sm:$0xf]
    %v1333 = vld [vmem:[%s1319 + $0x34] sm:$0xf]
    %v1334 = vld [vmem:[%s1319 + $0x38] sm:$0xf]
    %v1335 = vld [vmem:[%s1319 + $0x3c] sm:$0xf]
    %v1352 = vunpack.c.l.b16 %v1320
    %v1353 = vunpack.c.l.b16 %v1321
    %v1354 = vunpack.c.l.b16 %v1322
    %v1355 = vunpack.c.l.b16 %v1323
    %v1356 = vunpack.c.l.b16 %v1324
    %v1357 = vunpack.c.l.b16 %v1325
    %v1358 = vunpack.c.l.b16 %v1326
    %v1359 = vunpack.c.l.b16 %v1327
    %v1360 = vunpack.c.l.b16 %v1328
    %v1361 = vunpack.c.l.b16 %v1329
    %v1362 = vunpack.c.l.b16 %v1330
    %v1363 = vunpack.c.l.b16 %v1331
    %v1364 = vunpack.c.l.b16 %v1332
    %v1365 = vunpack.c.l.b16 %v1333
    %v1366 = vunpack.c.l.b16 %v1334
    %v1367 = vunpack.c.l.b16 %v1335
    %v1368 = vpack.c.b16 %v1353, %v1352
    %v1369 = vpack.c.b16 %v1355, %v1354
    %v1370 = vpack.c.b16 %v1357, %v1356
    %v1371 = vpack.c.b16 %v1359, %v1358
    %v1372 = vpack.c.b16 %v1361, %v1360
    %v1373 = vpack.c.b16 %v1363, %v1362
    %v1374 = vpack.c.b16 %v1365, %v1364
    %v1375 = vpack.c.b16 %v1367, %v1366
    %1384 = vmatprep.subr.bf16.mxu0 0
    %1385 = vmatpush1.bf16.msra.mxu0 %v1368
    %1386 = vmatprep.subr.bf16.mxu0 0
    %1387 = vmatpush1.bf16.msra.mxu0 %v1369
    %1388 = vmatprep.subr.bf16.mxu0 0
    %1389 = vmatpush1.bf16.msra.mxu0 %v1370
    %1390 = vmatprep.subr.bf16.mxu0 0
    %1391 = vmatpush1.bf16.msra.mxu0 %v1371
    %1392 = vmatprep.subr.bf16.mxu0 0
    %1393 = vmatpush1.bf16.msra.mxu0 %v1372
    %1394 = vmatprep.subr.bf16.mxu0 0
    %1395 = vmatpush1.bf16.msra.mxu0 %v1373
    %1396 = vmatprep.subr.bf16.mxu0 0
    %1397 = vmatpush1.bf16.msra.mxu0 %v1374
    %1398 = vmatprep.subr.bf16.mxu0 0
    %1399 = vmatpush1.bf16.msra.mxu0 %v1375
    %1400 = vmatprep.subr.bf16.mxu0 0
    %1401 = vmatpush1.bf16.msra.mxu0 0
    %1402 = vmatprep.subr.bf16.mxu0 0
    %1403 = vmatpush1.bf16.msra.mxu0 0
    %1404 = vmatprep.subr.bf16.mxu0 0
    %1405 = vmatpush1.bf16.msra.mxu0 0
    %1406 = vmatprep.subr.bf16.mxu0 0
    %1407 = vmatpush1.bf16.msra.mxu0 0
    %1408 = vmatprep.subr.bf16.mxu0 0
    %1409 = vmatpush1.bf16.msra.mxu0 0
    %1410 = vmatprep.subr.bf16.mxu0 0
    %1411 = vmatpush1.bf16.msra.mxu0 0
    %1412 = vmatprep.subr.bf16.mxu0 0
    %1413 = vmatpush1.bf16.msra.mxu0 0
    %1414 = vmatprep.subr.bf16.mxu0 0
    %1415 = vmatpush1.bf16.msra.mxu0 0
    %1416 = vmatprep.mubr.bf16.mxu0 0
    %1417 = vmatmul.mubr.bf16.gmra.mrb[0].mxu0 %v1108
    %v1418 = vpop.f32.mrb[0].mxu0
    %v1419 = vadd.f32 0.0, %v1418
    %v1420 = vpop.f32.mrb[0].mxu0
    %v1421 = vpop.f32.mrb[0].mxu0
    %v1422 = vpop.f32.mrb[0].mxu0
    %1423 = vdwg.mxu0
    %v1424 = vadd.f32 %v1314, %v1419
    %v1425 = vlaneseq
    %v1426 = vshrl.u32 %v1425, 7
    %v1427 = vsub.s32 0, %v1426
    %v1428 = vrot.slane %v1095, %v1427
    %v1429 = vadd.f32 %v1424, %v1428
    %1430 = vst [vmem:[#allocation2 + $0x1] sm:$0xff] %v1429
    %v1431 = vld [vmem:[%s477] ss:$2 sm:$0xf]
    %v1432 = vld [vmem:[%s989] ss:$2 sm:$0xf]
    %v1433 = vld [vmem:[#allocation2] ss:$2 sm:$0xf]
    %v1434 = vand.u32 %v62, 1
    %vm1435 = vcmp.ne.s32.totalorder %v1434, 0
    %v1436 = vsel %vm1435, 1, 0
    %vm1437 = vcmp.eq.s32.totalorder %v1436, 1
    %v1438 = vsel %vm1437, %v1433, 0.0
    %1440 = vrot.lane.b32.xlu0 %v1431, 96
    %v1441 = vpop.permute.xlu0 %1440
    %1444 = vrot.lane.b32.xlu0 %v1432, 64
    %v1445 = vpop.permute.xlu0 %1444
    %1447 = vrot.lane.b32.xlu0 %v1432, 32
    %v1448 = vpop.permute.xlu0 %1447
    %v1450 = vsel %vm520, %v1431, %v1441
    %v1451 = vsel %vm523, %v1450, %v1445
    %v1452 = vsel %vm526, %v1451, %v1448
    %1453 = vrot.lane.b32.xlu0 %v1431, 64
    %v1454 = vpop.permute.xlu0 %1453
    %v1456 = vsel %vm520, %v1441, %v1454
    %v1457 = vsel %vm523, %v1456, %v1448
    %v1458 = vsel %vm526, %v1457, %v1432
    %1460 = vrot.lane.b32.xlu0 %v1438, 32
    %v1461 = vpop.permute.xlu0 %1460
    %1464 = vrot.lane.b32.xlu0 %v1458, 32
    %v1465 = vpop.permute.xlu0 %1464
    %v1467 = vsel %vm520, %v1461, %v1465
    %v1468 = vadd.f32 %v1467, %v1452
    %v1469 = vadd.f32 %v1468, %v1458
    %v1470 = vmul.f32 %v1469, 0.33333334
    %vm1471 = vcmask 1043456
    %v1472 = vsel %vm1471, %v1470, 0.0
    %v1473 = vrot.slane %v1472, 4
    %v1474 = vadd.f32 %v1472, %v1473
    %v1475 = vrot.slane %v1474, 2
    %v1476 = vadd.f32 %v1474, %v1475
    %v1477 = vrot.slane %v1476, 1
    %v1478 = vadd.f32 %v1476, %v1477
    %v1479 = vmul.f32 %v1470, %v1470
    %v1480 = vsel %vm1471, %v1479, 0.0
    %v1481 = vrot.slane %v1480, 4
    %v1482 = vadd.f32 %v1480, %v1481
    %v1483 = vrot.slane %v1482, 2
    %v1484 = vadd.f32 %v1482, %v1483
    %v1485 = vrot.slane %v1484, 1
    %v1486 = vadd.f32 %v1484, %v1485
    %v1487 = vsel %vm581, %v1478, %v1486
    %1489 = vrot.lane.b32.xlu0 %v1487, 96
    %v1490 = vpop.permute.xlu0 %1489
    %v1492 = vadd.f32 %v1487, %v1490
    %1493 = vrot.lane.b32.xlu0 %v1487, 64
    %v1494 = vpop.permute.xlu0 %1493
    %v1496 = vadd.f32 %v1492, %v1494
    %1497 = vrot.lane.b32.xlu0 %v1487, 32
    %v1498 = vpop.permute.xlu0 %1497
    %v1500 = vadd.f32 %v1496, %v1498
    %1502 = vrot.lane.b32.xlu0 %v1500, 32
    %v1503 = vpop.permute.xlu0 %1502
    %1505 = vrot.lane.b32.xlu0 %v1500, 64
    %v1506 = vpop.permute.xlu0 %1505
    %1508 = vrot.lane.b32.xlu0 %v1500, 96
    %v1509 = vpop.permute.xlu0 %1508
    %v1511 = vsel %vm520, %v1500, %v1503
    %v1512 = vsel %vm523, %v1511, %v1506
    %v1513 = vsel %vm526, %v1512, %v1509
    %v1514 = vmul.f32 %v1513, 0.0625
    %v1515 = vmul.f32 %v1514, %v1514
    %v1517 = vrot.slane %v1515, 7
    %v1519 = vsub.f32 %v1514, %v1517
    %v1520 = vadd.f32 %v1519, 1e-05
    %v1521 = vrsqrt.pop %v1520
    %v1523 = vrot.slane %v1521, 1
    %v1525 = vmul.f32 %v1096, %v1523
    %v1526 = vlaneseq
    %v1527 = vshrl.u32 %v1526, 7
    %v1528 = vsub.s32 0, %v1527
    %v1529 = vrot.slane %v1525, %v1528
    %v1530 = vmul.f32 %v1470, %v1529
    %v1531 = vmul.f32 %v1514, %v1525
    %v1532 = vsub.f32 %v1097, %v1531
    %v1533 = vlaneseq
    %v1534 = vshrl.u32 %v1533, 7
    %v1535 = vsub.s32 0, %v1534
    %v1536 = vrot.slane %v1532, %v1535
    %v1537 = vadd.f32 %v1530, %v1536
    %1538 = vst [vmem:[#allocation2 + $0x1] sm:$0xf] %v1537
    %1539 = vst [vmem:[#allocation2 + $0x5] sm:$0x1] 0.0
    %v1540 = vld [vmem:[#allocation8 + $0x3] sm:$0x1]
    %v1541 = vld [vmem:[#allocation8 + $0x7] sm:$0x1]
    %v1542 = vld [vmem:[#allocation8 + $0xb] sm:$0x1]
    %v1543 = vld [vmem:[#allocation2] sm:$0xf]
    %v1544 = vsel %vm1437, %v1543, 0.0
    %v1545 = vpack.c.bf16 %v1544, %v1544
    %v1546 = vld [vmem:[#allocation2 + $0x1] sm:$0xf]
    %v1547 = vpack.c.bf16 %v1546, %v1546
    %vm1548 = vcmp.ne.s32.totalorder %v1434, 1
    %v1549 = vld [vmem:[#allocation2 + $0x2] sm:$0xf]
    %v1550 = vsel %vm1548, 1, 0
    %vm1551 = vcmp.eq.s32.totalorder %v1550, 1
    %v1552 = vsel %vm1551, %v1549, 0.0
    %v1553 = vpack.c.bf16 %v1552, %v1552
    %s1554 = scalar_lea.vmem [#allocation6], 576
    %v1555 = vld [vmem:[%s1554] sm:$0xf]
    %v1556 = vld [vmem:[%s1554 + $0x4] sm:$0xf]
    %v1557 = vld [vmem:[%s1554 + $0x8] sm:$0xf]
    %v1558 = vld [vmem:[%s1554 + $0xc] sm:$0xf]
    %v1559 = vld [vmem:[%s1554 + $0x10] sm:$0xf]
    %v1560 = vld [vmem:[%s1554 + $0x14] sm:$0xf]
    %v1561 = vld [vmem:[%s1554 + $0x18] sm:$0xf]
    %v1562 = vld [vmem:[%s1554 + $0x1c] sm:$0xf]
    %v1563 = vld [vmem:[%s1554 + $0x20] sm:$0xf]
    %v1564 = vld [vmem:[%s1554 + $0x24] sm:$0xf]
    %v1565 = vld [vmem:[%s1554 + $0x28] sm:$0xf]
    %v1566 = vld [vmem:[%s1554 + $0x2c] sm:$0xf]
    %v1567 = vld [vmem:[%s1554 + $0x30] sm:$0xf]
    %v1568 = vld [vmem:[%s1554 + $0x34] sm:$0xf]
    %v1569 = vld [vmem:[%s1554 + $0x38] sm:$0xf]
    %v1570 = vld [vmem:[%s1554 + $0x3c] sm:$0xf]
    %s1571 = scalar_lea.vmem [#allocation6], 640
    %v1572 = vld [vmem:[%s1571] sm:$0xf]
    %v1573 = vld [vmem:[%s1571 + $0x4] sm:$0xf]
    %v1574 = vld [vmem:[%s1571 + $0x8] sm:$0xf]
    %v1575 = vld [vmem:[%s1571 + $0xc] sm:$0xf]
    %v1576 = vld [vmem:[%s1571 + $0x10] sm:$0xf]
    %v1577 = vld [vmem:[%s1571 + $0x14] sm:$0xf]
    %v1578 = vld [vmem:[%s1571 + $0x18] sm:$0xf]
    %v1579 = vld [vmem:[%s1571 + $0x1c] sm:$0xf]
    %v1580 = vld [vmem:[%s1571 + $0x20] sm:$0xf]
    %v1581 = vld [vmem:[%s1571 + $0x24] sm:$0xf]
    %v1582 = vld [vmem:[%s1571 + $0x28] sm:$0xf]
    %v1583 = vld [vmem:[%s1571 + $0x2c] sm:$0xf]
    %v1584 = vld [vmem:[%s1571 + $0x30] sm:$0xf]
    %v1585 = vld [vmem:[%s1571 + $0x34] sm:$0xf]
    %v1586 = vld [vmem:[%s1571 + $0x38] sm:$0xf]
    %v1587 = vld [vmem:[%s1571 + $0x3c] sm:$0xf]
    %v1604 = vunpack.c.l.b16 %v1572
    %v1605 = vunpack.c.l.b16 %v1573
    %v1606 = vunpack.c.l.b16 %v1574
    %v1607 = vunpack.c.l.b16 %v1575
    %v1608 = vunpack.c.l.b16 %v1576
    %v1609 = vunpack.c.l.b16 %v1577
    %v1610 = vunpack.c.l.b16 %v1578
    %v1611 = vunpack.c.l.b16 %v1579
    %v1612 = vunpack.c.l.b16 %v1580
    %v1613 = vunpack.c.l.b16 %v1581
    %v1614 = vunpack.c.l.b16 %v1582
    %v1615 = vunpack.c.l.b16 %v1583
    %v1616 = vunpack.c.l.b16 %v1584
    %v1617 = vunpack.c.l.b16 %v1585
    %v1618 = vunpack.c.l.b16 %v1586
    %v1619 = vunpack.c.l.b16 %v1587
    %v1620 = vpack.c.b16 %v1605, %v1604
    %v1621 = vpack.c.b16 %v1607, %v1606
    %v1622 = vpack.c.b16 %v1609, %v1608
    %v1623 = vpack.c.b16 %v1611, %v1610
    %v1624 = vpack.c.b16 %v1613, %v1612
    %v1625 = vpack.c.b16 %v1615, %v1614
    %v1626 = vpack.c.b16 %v1617, %v1616
    %v1627 = vpack.c.b16 %v1619, %v1618
    %1636 = vmatprep.subr.bf16.mxu0 0
    %1637 = vmatpush1.bf16.msra.mxu0 %v1620
    %1638 = vmatprep.subr.bf16.mxu0 0
    %1639 = vmatpush1.bf16.msra.mxu0 %v1621
    %1640 = vmatprep.subr.bf16.mxu0 0
    %1641 = vmatpush1.bf16.msra.mxu0 %v1622
    %1642 = vmatprep.subr.bf16.mxu0 0
    %1643 = vmatpush1.bf16.msra.mxu0 %v1623
    %1644 = vmatprep.subr.bf16.mxu0 0
    %1645 = vmatpush1.bf16.msra.mxu0 %v1624
    %1646 = vmatprep.subr.bf16.mxu0 0
    %1647 = vmatpush1.bf16.msra.mxu0 %v1625
    %1648 = vmatprep.subr.bf16.mxu0 0
    %1649 = vmatpush1.bf16.msra.mxu0 %v1626
    %1650 = vmatprep.subr.bf16.mxu0 0
    %1651 = vmatpush1.bf16.msra.mxu0 %v1627
    %1652 = vmatprep.subr.bf16.mxu0 0
    %1653 = vmatpush1.bf16.msra.mxu0 0
    %1654 = vmatprep.subr.bf16.mxu0 0
    %1655 = vmatpush1.bf16.msra.mxu0 0
    %1656 = vmatprep.subr.bf16.mxu0 0
    %1657 = vmatpush1.bf16.msra.mxu0 0
    %1658 = vmatprep.subr.bf16.mxu0 0
    %1659 = vmatpush1.bf16.msra.mxu0 0
    %1660 = vmatprep.subr.bf16.mxu0 0
    %1661 = vmatpush1.bf16.msra.mxu0 0
    %1662 = vmatprep.subr.bf16.mxu0 0
    %1663 = vmatpush1.bf16.msra.mxu0 0
    %1664 = vmatprep.subr.bf16.mxu0 0
    %1665 = vmatpush1.bf16.msra.mxu0 0
    %1666 = vmatprep.subr.bf16.mxu0 0
    %1667 = vmatpush1.bf16.msra.mxu0 0
    %1668 = vmatprep.mubr.bf16.mxu0 0
    %1669 = vmatmul.mubr.bf16.gmra.mrb[0].mxu0 %v1545
    %v1670 = vpop.f32.mrb[0].mxu0
    %v1671 = vadd.f32 0.0, %v1670
    %v1672 = vpop.f32.mrb[0].mxu0
    %v1673 = vpop.f32.mrb[0].mxu0
    %v1674 = vpop.f32.mrb[0].mxu0
    %1675 = vdwg.mxu0
    %v1692 = vunpack.c.l.b16 %v1555
    %v1693 = vunpack.c.l.b16 %v1556
    %v1694 = vunpack.c.l.b16 %v1557
    %v1695 = vunpack.c.l.b16 %v1558
    %v1696 = vunpack.c.l.b16 %v1559
    %v1697 = vunpack.c.l.b16 %v1560
    %v1698 = vunpack.c.l.b16 %v1561
    %v1699 = vunpack.c.l.b16 %v1562
    %v1700 = vunpack.c.l.b16 %v1563
    %v1701 = vunpack.c.l.b16 %v1564
    %v1702 = vunpack.c.l.b16 %v1565
    %v1703 = vunpack.c.l.b16 %v1566
    %v1704 = vunpack.c.l.b16 %v1567
    %v1705 = vunpack.c.l.b16 %v1568
    %v1706 = vunpack.c.l.b16 %v1569
    %v1707 = vunpack.c.l.b16 %v1570
    %v1708 = vpack.c.b16 %v1693, %v1692
    %v1709 = vpack.c.b16 %v1695, %v1694
    %v1710 = vpack.c.b16 %v1697, %v1696
    %v1711 = vpack.c.b16 %v1699, %v1698
    %v1712 = vpack.c.b16 %v1701, %v1700
    %v1713 = vpack.c.b16 %v1703, %v1702
    %v1714 = vpack.c.b16 %v1705, %v1704
    %v1715 = vpack.c.b16 %v1707, %v1706
    %1724 = vmatprep.subr.bf16.mxu0 0
    %1725 = vmatpush1.bf16.msra.mxu0 %v1708
    %1726 = vmatprep.subr.bf16.mxu0 0
    %1727 = vmatpush1.bf16.msra.mxu0 %v1709
    %1728 = vmatprep.subr.bf16.mxu0 0
    %1729 = vmatpush1.bf16.msra.mxu0 %v1710
    %1730 = vmatprep.subr.bf16.mxu0 0
    %1731 = vmatpush1.bf16.msra.mxu0 %v1711
    %1732 = vmatprep.subr.bf16.mxu0 0
    %1733 = vmatpush1.bf16.msra.mxu0 %v1712
    %1734 = vmatprep.subr.bf16.mxu0 0
    %1735 = vmatpush1.bf16.msra.mxu0 %v1713
    %1736 = vmatprep.subr.bf16.mxu0 0
    %1737 = vmatpush1.bf16.msra.mxu0 %v1714
    %1738 = vmatprep.subr.bf16.mxu0 0
    %1739 = vmatpush1.bf16.msra.mxu0 %v1715
    %1740 = vmatprep.subr.bf16.mxu0 0
    %1741 = vmatpush1.bf16.msra.mxu0 0
    %1742 = vmatprep.subr.bf16.mxu0 0
    %1743 = vmatpush1.bf16.msra.mxu0 0
    %1744 = vmatprep.subr.bf16.mxu0 0
    %1745 = vmatpush1.bf16.msra.mxu0 0
    %1746 = vmatprep.subr.bf16.mxu0 0
    %1747 = vmatpush1.bf16.msra.mxu0 0
    %1748 = vmatprep.subr.bf16.mxu0 0
    %1749 = vmatpush1.bf16.msra.mxu0 0
    %1750 = vmatprep.subr.bf16.mxu0 0
    %1751 = vmatpush1.bf16.msra.mxu0 0
    %1752 = vmatprep.subr.bf16.mxu0 0
    %1753 = vmatpush1.bf16.msra.mxu0 0
    %1754 = vmatprep.subr.bf16.mxu0 0
    %1755 = vmatpush1.bf16.msra.mxu0 0
    %1756 = vmatprep.mubr.bf16.mxu0 0
    %1757 = vmatmul.mubr.bf16.gmra.mrb[0].mxu0 %v1547
    %v1758 = vpop.f32.mrb[0].mxu0
    %v1759 = vadd.f32 %v1671, %v1758
    %v1760 = vpop.f32.mrb[0].mxu0
    %v1761 = vpop.f32.mrb[0].mxu0
    %v1762 = vpop.f32.mrb[0].mxu0
    %1763 = vdwg.mxu0
    %s1764 = scalar_lea.vmem [#allocation6], 704
    %v1765 = vld [vmem:[%s1764] sm:$0xf]
    %v1766 = vld [vmem:[%s1764 + $0x4] sm:$0xf]
    %v1767 = vld [vmem:[%s1764 + $0x8] sm:$0xf]
    %v1768 = vld [vmem:[%s1764 + $0xc] sm:$0xf]
    %v1769 = vld [vmem:[%s1764 + $0x10] sm:$0xf]
    %v1770 = vld [vmem:[%s1764 + $0x14] sm:$0xf]
    %v1771 = vld [vmem:[%s1764 + $0x18] sm:$0xf]
    %v1772 = vld [vmem:[%s1764 + $0x1c] sm:$0xf]
    %v1773 = vld [vmem:[%s1764 + $0x20] sm:$0xf]
    %v1774 = vld [vmem:[%s1764 + $0x24] sm:$0xf]
    %v1775 = vld [vmem:[%s1764 + $0x28] sm:$0xf]
    %v1776 = vld [vmem:[%s1764 + $0x2c] sm:$0xf]
    %v1777 = vld [vmem:[%s1764 + $0x30] sm:$0xf]
    %v1778 = vld [vmem:[%s1764 + $0x34] sm:$0xf]
    %v1779 = vld [vmem:[%s1764 + $0x38] sm:$0xf]
    %v1780 = vld [vmem:[%s1764 + $0x3c] sm:$0xf]
    %v1797 = vunpack.c.l.b16 %v1765
    %v1798 = vunpack.c.l.b16 %v1766
    %v1799 = vunpack.c.l.b16 %v1767
    %v1800 = vunpack.c.l.b16 %v1768
    %v1801 = vunpack.c.l.b16 %v1769
    %v1802 = vunpack.c.l.b16 %v1770
    %v1803 = vunpack.c.l.b16 %v1771
    %v1804 = vunpack.c.l.b16 %v1772
    %v1805 = vunpack.c.l.b16 %v1773
    %v1806 = vunpack.c.l.b16 %v1774
    %v1807 = vunpack.c.l.b16 %v1775
    %v1808 = vunpack.c.l.b16 %v1776
    %v1809 = vunpack.c.l.b16 %v1777
    %v1810 = vunpack.c.l.b16 %v1778
    %v1811 = vunpack.c.l.b16 %v1779
    %v1812 = vunpack.c.l.b16 %v1780
    %v1813 = vpack.c.b16 %v1798, %v1797
    %v1814 = vpack.c.b16 %v1800, %v1799
    %v1815 = vpack.c.b16 %v1802, %v1801
    %v1816 = vpack.c.b16 %v1804, %v1803
    %v1817 = vpack.c.b16 %v1806, %v1805
    %v1818 = vpack.c.b16 %v1808, %v1807
    %v1819 = vpack.c.b16 %v1810, %v1809
    %v1820 = vpack.c.b16 %v1812, %v1811
    %1829 = vmatprep.subr.bf16.mxu0 0
    %1830 = vmatpush1.bf16.msra.mxu0 %v1813
    %1831 = vmatprep.subr.bf16.mxu0 0
    %1832 = vmatpush1.bf16.msra.mxu0 %v1814
    %1833 = vmatprep.subr.bf16.mxu0 0
    %1834 = vmatpush1.bf16.msra.mxu0 %v1815
    %1835 = vmatprep.subr.bf16.mxu0 0
    %1836 = vmatpush1.bf16.msra.mxu0 %v1816
    %1837 = vmatprep.subr.bf16.mxu0 0
    %1838 = vmatpush1.bf16.msra.mxu0 %v1817
    %1839 = vmatprep.subr.bf16.mxu0 0
    %1840 = vmatpush1.bf16.msra.mxu0 %v1818
    %1841 = vmatprep.subr.bf16.mxu0 0
    %1842 = vmatpush1.bf16.msra.mxu0 %v1819
    %1843 = vmatprep.subr.bf16.mxu0 0
    %1844 = vmatpush1.bf16.msra.mxu0 %v1820
    %1845 = vmatprep.subr.bf16.mxu0 0
    %1846 = vmatpush1.bf16.msra.mxu0 0
    %1847 = vmatprep.subr.bf16.mxu0 0
    %1848 = vmatpush1.bf16.msra.mxu0 0
    %1849 = vmatprep.subr.bf16.mxu0 0
    %1850 = vmatpush1.bf16.msra.mxu0 0
    %1851 = vmatprep.subr.bf16.mxu0 0
    %1852 = vmatpush1.bf16.msra.mxu0 0
    %1853 = vmatprep.subr.bf16.mxu0 0
    %1854 = vmatpush1.bf16.msra.mxu0 0
    %1855 = vmatprep.subr.bf16.mxu0 0
    %1856 = vmatpush1.bf16.msra.mxu0 0
    %1857 = vmatprep.subr.bf16.mxu0 0
    %1858 = vmatpush1.bf16.msra.mxu0 0
    %1859 = vmatprep.subr.bf16.mxu0 0
    %1860 = vmatpush1.bf16.msra.mxu0 0
    %1861 = vmatprep.mubr.bf16.mxu0 0
    %1862 = vmatmul.mubr.bf16.gmra.mrb[0].mxu0 %v1553
    %v1863 = vpop.f32.mrb[0].mxu0
    %v1864 = vadd.f32 0.0, %v1863
    %v1865 = vpop.f32.mrb[0].mxu0
    %v1866 = vpop.f32.mrb[0].mxu0
    %v1867 = vpop.f32.mrb[0].mxu0
    %1868 = vdwg.mxu0
    %v1869 = vadd.f32 %v1759, %v1864
    %v1870 = vlaneseq
    %v1871 = vshrl.u32 %v1870, 7
    %v1872 = vsub.s32 0, %v1871
    %v1873 = vrot.slane %v1540, %v1872
    %v1874 = vadd.f32 %v1869, %v1873
    %1875 = vst [vmem:[#allocation2 + $0x1] sm:$0xf] %v1874
    %v1876 = vld [vmem:[%s477] ss:$2 sm:$0x3]
    %v1877 = vld [vmem:[%s989] ss:$2 sm:$0x3]
    %1879 = vrot.lane.b32.xlu0 %v1876, 96
    %v1880 = vpop.permute.xlu0 %1879
    %1883 = vrot.lane.b32.xlu0 %v1877, 64
    %v1884 = vpop.permute.xlu0 %1883
    %1886 = vrot.lane.b32.xlu0 %v1877, 32
    %v1887 = vpop.permute.xlu0 %1886
    %v1889 = vsel %vm520, %v1876, %v1880
    %v1890 = vsel %vm523, %v1889, %v1884
    %v1891 = vsel %vm526, %v1890, %v1887
    %1892 = vrot.lane.b32.xlu0 %v1876, 64
    %v1893 = vpop.permute.xlu0 %1892
    %v1895 = vsel %vm520, %v1880, %v1893
    %v1896 = vsel %vm523, %v1895, %v1887
    %v1897 = vsel %vm526, %v1896, %v1877
    %1899 = vrot.lane.b32.xlu0 %v1897, 32
    %v1900 = vpop.permute.xlu0 %1899
    %v1902 = vsel %vm520, 0.0, %v1900
    %v1903 = vadd.f32 %v1902, %v1891
    %v1904 = vadd.f32 %v1903, %v1897
    %v1905 = vmul.f32 %v1904, 0.33333334
    %vm1906 = vcmask 1041408
    %v1907 = vsel %vm1906, %v1905, 0.0
    %v1908 = vrot.slane %v1907, 4
    %v1909 = vadd.f32 %v1907, %v1908
    %v1910 = vrot.slane %v1909, 2
    %v1911 = vadd.f32 %v1909, %v1910
    %v1912 = vrot.slane %v1911, 1
    %v1913 = vadd.f32 %v1911, %v1912
    %v1914 = vmul.f32 %v1905, %v1905
    %v1915 = vsel %vm1906, %v1914, 0.0
    %v1916 = vrot.slane %v1915, 4
    %v1917 = vadd.f32 %v1915, %v1916
    %v1918 = vrot.slane %v1917, 2
    %v1919 = vadd.f32 %v1917, %v1918
    %v1920 = vrot.slane %v1919, 1
    %v1921 = vadd.f32 %v1919, %v1920
    %v1922 = vsel %vm581, %v1913, %v1921
    %1924 = vrot.lane.b32.xlu0 %v1922, 96
    %v1925 = vpop.permute.xlu0 %1924
    %v1927 = vadd.f32 %v1922, %v1925
    %1928 = vrot.lane.b32.xlu0 %v1922, 64
    %v1929 = vpop.permute.xlu0 %1928
    %v1931 = vadd.f32 %v1927, %v1929
    %1932 = vrot.lane.b32.xlu0 %v1922, 32
    %v1933 = vpop.permute.xlu0 %1932
    %v1935 = vadd.f32 %v1931, %v1933
    %1937 = vrot.lane.b32.xlu0 %v1935, 32
    %v1938 = vpop.permute.xlu0 %1937
    %1940 = vrot.lane.b32.xlu0 %v1935, 64
    %v1941 = vpop.permute.xlu0 %1940
    %1943 = vrot.lane.b32.xlu0 %v1935, 96
    %v1944 = vpop.permute.xlu0 %1943
    %v1946 = vsel %vm520, %v1935, %v1938
    %v1947 = vsel %vm523, %v1946, %v1941
    %v1948 = vsel %vm526, %v1947, %v1944
    %v1949 = vmul.f32 %v1948, 0.125
    %v1950 = vmul.f32 %v1949, %v1949
    %v1952 = vrot.slane %v1950, 7
    %v1954 = vsub.f32 %v1949, %v1952
    %v1955 = vadd.f32 %v1954, 1e-05
    %v1956 = vrsqrt.pop %v1955
    %v1958 = vrot.slane %v1956, 1
    %v1960 = vmul.f32 %v1541, %v1958
    %v1961 = vlaneseq
    %v1962 = vshrl.u32 %v1961, 7
    %v1963 = vsub.s32 0, %v1962
    %v1964 = vrot.slane %v1960, %v1963
    %v1965 = vmul.f32 %v1905, %v1964
    %v1966 = vmul.f32 %v1949, %v1960
    %v1967 = vsub.f32 %v1542, %v1966
    %v1968 = vlaneseq
    %v1969 = vshrl.u32 %v1968, 7
    %v1970 = vsub.s32 0, %v1969
    %v1971 = vrot.slane %v1967, %v1970
    %v1972 = vadd.f32 %v1965, %v1971
    %v1973 = vpack.c.bf16 %v1972, %v1972
    %s1974 = scalar_lea.vmem [#allocation6], 768
    %v1975 = vld [vmem:[%s1974] sm:$0xf]
    %v1976 = vld [vmem:[%s1974 + $0x4] sm:$0xf]
    %v1977 = vld [vmem:[%s1974 + $0x8] sm:$0xf]
    %v1978 = vld [vmem:[%s1974 + $0xc] sm:$0xf]
    %v1979 = vld [vmem:[%s1974 + $0x10] sm:$0xf]
    %v1980 = vld [vmem:[%s1974 + $0x14] sm:$0xf]
    %v1981 = vld [vmem:[%s1974 + $0x18] sm:$0xf]
    %v1982 = vld [vmem:[%s1974 + $0x1c] sm:$0xf]
    %v1983 = vld [vmem:[%s1974 + $0x20] sm:$0xf]
    %v1984 = vld [vmem:[%s1974 + $0x24] sm:$0xf]
    %v1985 = vld [vmem:[%s1974 + $0x28] sm:$0xf]
    %v1986 = vld [vmem:[%s1974 + $0x2c] sm:$0xf]
    %v1987 = vld [vmem:[%s1974 + $0x30] sm:$0xf]
    %v1988 = vld [vmem:[%s1974 + $0x34] sm:$0xf]
    %v1989 = vld [vmem:[%s1974 + $0x38] sm:$0xf]
    %v1990 = vld [vmem:[%s1974 + $0x3c] sm:$0xf]
    %v1991 = vld [vmem:[#allocation8 + $0xc] sm:$0x1]
    %v1992 = vlaneseq
    %v1993 = vshrl.u32 %v1992, 7
    %v1994 = vsub.s32 0, %v1993
    %v1995 = vrot.slane %v1991, %v1994
    %v2012 = vunpack.c.l.b16 %v1975
    %v2013 = vunpack.c.l.b16 %v1976
    %v2014 = vunpack.c.l.b16 %v1977
    %v2015 = vunpack.c.l.b16 %v1978
    %v2016 = vunpack.c.l.b16 %v1979
    %v2017 = vunpack.c.l.b16 %v1980
    %v2018 = vunpack.c.l.b16 %v1981
    %v2019 = vunpack.c.l.b16 %v1982
    %v2020 = vunpack.c.l.b16 %v1983
    %v2021 = vunpack.c.l.b16 %v1984
    %v2022 = vunpack.c.l.b16 %v1985
    %v2023 = vunpack.c.l.b16 %v1986
    %v2024 = vunpack.c.l.b16 %v1987
    %v2025 = vunpack.c.l.b16 %v1988
    %v2026 = vunpack.c.l.b16 %v1989
    %v2027 = vunpack.c.l.b16 %v1990
    %v2028 = vpack.c.b16 %v2013, %v2012
    %v2029 = vpack.c.b16 %v2015, %v2014
    %v2030 = vpack.c.b16 %v2017, %v2016
    %v2031 = vpack.c.b16 %v2019, %v2018
    %v2032 = vpack.c.b16 %v2021, %v2020
    %v2033 = vpack.c.b16 %v2023, %v2022
    %v2034 = vpack.c.b16 %v2025, %v2024
    %v2035 = vpack.c.b16 %v2027, %v2026
    %2044 = vmatprep.subr.bf16.mxu0 0
    %2045 = vmatpush1.bf16.msra.mxu0 %v2028
    %2046 = vmatprep.subr.bf16.mxu0 0
    %2047 = vmatpush1.bf16.msra.mxu0 %v2029
    %2048 = vmatprep.subr.bf16.mxu0 0
    %2049 = vmatpush1.bf16.msra.mxu0 %v2030
    %2050 = vmatprep.subr.bf16.mxu0 0
    %2051 = vmatpush1.bf16.msra.mxu0 %v2031
    %2052 = vmatprep.subr.bf16.mxu0 0
    %2053 = vmatpush1.bf16.msra.mxu0 %v2032
    %2054 = vmatprep.subr.bf16.mxu0 0
    %2055 = vmatpush1.bf16.msra.mxu0 %v2033
    %2056 = vmatprep.subr.bf16.mxu0 0
    %2057 = vmatpush1.bf16.msra.mxu0 %v2034
    %2058 = vmatprep.subr.bf16.mxu0 0
    %2059 = vmatpush1.bf16.msra.mxu0 %v2035
    %2060 = vmatprep.subr.bf16.mxu0 0
    %2061 = vmatpush1.bf16.msra.mxu0 0
    %2062 = vmatprep.subr.bf16.mxu0 0
    %2063 = vmatpush1.bf16.msra.mxu0 0
    %2064 = vmatprep.subr.bf16.mxu0 0
    %2065 = vmatpush1.bf16.msra.mxu0 0
    %2066 = vmatprep.subr.bf16.mxu0 0
    %2067 = vmatpush1.bf16.msra.mxu0 0
    %2068 = vmatprep.subr.bf16.mxu0 0
    %2069 = vmatpush1.bf16.msra.mxu0 0
    %2070 = vmatprep.subr.bf16.mxu0 0
    %2071 = vmatpush1.bf16.msra.mxu0 0
    %2072 = vmatprep.subr.bf16.mxu0 0
    %2073 = vmatpush1.bf16.msra.mxu0 0
    %2074 = vmatprep.subr.bf16.mxu0 0
    %2075 = vmatpush1.bf16.msra.mxu0 0
    %2076 = vmatprep.mubr.bf16.mxu0 0
    %2077 = vmatmul.mubr.bf16.gmra.mrb[0].mxu0 %v1973
    %v2078 = vpop.f32.mrb[0].mxu0
    %v2079 = vadd.f32 %v1995, %v2078
    %v2080 = vpop.f32.mrb[0].mxu0
    %v2081 = vpop.f32.mrb[0].mxu0
    %v2082 = vpop.f32.mrb[0].mxu0
    %2083 = vdwg.mxu0
    %v2084 = vmax.f32 %v2079, 0.0
    %v2085 = vpack.c.bf16 %v2084, %v2084
    %s2086 = scalar_lea.vmem [#allocation6], 832
    %v2087 = vld [vmem:[%s2086] sm:$0xf]
    %v2088 = vld [vmem:[%s2086 + $0x4] sm:$0xf]
    %v2089 = vld [vmem:[%s2086 + $0x8] sm:$0xf]
    %v2090 = vld [vmem:[%s2086 + $0xc] sm:$0xf]
    %v2091 = vld [vmem:[%s2086 + $0x10] sm:$0xf]
    %v2092 = vld [vmem:[%s2086 + $0x14] sm:$0xf]
    %v2093 = vld [vmem:[%s2086 + $0x18] sm:$0xf]
    %v2094 = vld [vmem:[%s2086 + $0x1c] sm:$0xf]
    %v2095 = vld [vmem:[%s2086 + $0x20] sm:$0xf]
    %v2096 = vld [vmem:[%s2086 + $0x24] sm:$0xf]
    %v2097 = vld [vmem:[%s2086 + $0x28] sm:$0xf]
    %v2098 = vld [vmem:[%s2086 + $0x2c] sm:$0xf]
    %v2099 = vld [vmem:[%s2086 + $0x30] sm:$0xf]
    %v2100 = vld [vmem:[%s2086 + $0x34] sm:$0xf]
    %v2101 = vld [vmem:[%s2086 + $0x38] sm:$0xf]
    %v2102 = vld [vmem:[%s2086 + $0x3c] sm:$0xf]
    %v2103 = vld [vmem:[#allocation8 + $0xd] sm:$0x1]
    %v2104 = vlaneseq
    %v2105 = vshrl.u32 %v2104, 7
    %v2106 = vsub.s32 0, %v2105
    %v2107 = vrot.slane %v2103, %v2106
    %v2124 = vunpack.c.l.b16 %v2087
    %v2125 = vunpack.c.l.b16 %v2088
    %v2126 = vunpack.c.l.b16 %v2089
    %v2127 = vunpack.c.l.b16 %v2090
    %v2128 = vunpack.c.l.b16 %v2091
    %v2129 = vunpack.c.l.b16 %v2092
    %v2130 = vunpack.c.l.b16 %v2093
    %v2131 = vunpack.c.l.b16 %v2094
    %v2132 = vunpack.c.l.b16 %v2095
    %v2133 = vunpack.c.l.b16 %v2096
    %v2134 = vunpack.c.l.b16 %v2097
    %v2135 = vunpack.c.l.b16 %v2098
    %v2136 = vunpack.c.l.b16 %v2099
    %v2137 = vunpack.c.l.b16 %v2100
    %v2138 = vunpack.c.l.b16 %v2101
    %v2139 = vunpack.c.l.b16 %v2102
    %v2140 = vpack.c.b16 %v2125, %v2124
    %v2141 = vpack.c.b16 %v2127, %v2126
    %v2142 = vpack.c.b16 %v2129, %v2128
    %v2143 = vpack.c.b16 %v2131, %v2130
    %v2144 = vpack.c.b16 %v2133, %v2132
    %v2145 = vpack.c.b16 %v2135, %v2134
    %v2146 = vpack.c.b16 %v2137, %v2136
    %v2147 = vpack.c.b16 %v2139, %v2138
    %2156 = vmatprep.subr.bf16.mxu0 0
    %2157 = vmatpush1.bf16.msra.mxu0 %v2140
    %2158 = vmatprep.subr.bf16.mxu0 0
    %2159 = vmatpush1.bf16.msra.mxu0 %v2141
    %2160 = vmatprep.subr.bf16.mxu0 0
    %2161 = vmatpush1.bf16.msra.mxu0 %v2142
    %2162 = vmatprep.subr.bf16.mxu0 0
    %2163 = vmatpush1.bf16.msra.mxu0 %v2143
    %2164 = vmatprep.subr.bf16.mxu0 0
    %2165 = vmatpush1.bf16.msra.mxu0 %v2144
    %2166 = vmatprep.subr.bf16.mxu0 0
    %2167 = vmatpush1.bf16.msra.mxu0 %v2145
    %2168 = vmatprep.subr.bf16.mxu0 0
    %2169 = vmatpush1.bf16.msra.mxu0 %v2146
    %2170 = vmatprep.subr.bf16.mxu0 0
    %2171 = vmatpush1.bf16.msra.mxu0 %v2147
    %2172 = vmatprep.subr.bf16.mxu0 0
    %2173 = vmatpush1.bf16.msra.mxu0 0
    %2174 = vmatprep.subr.bf16.mxu0 0
    %2175 = vmatpush1.bf16.msra.mxu0 0
    %2176 = vmatprep.subr.bf16.mxu0 0
    %2177 = vmatpush1.bf16.msra.mxu0 0
    %2178 = vmatprep.subr.bf16.mxu0 0
    %2179 = vmatpush1.bf16.msra.mxu0 0
    %2180 = vmatprep.subr.bf16.mxu0 0
    %2181 = vmatpush1.bf16.msra.mxu0 0
    %2182 = vmatprep.subr.bf16.mxu0 0
    %2183 = vmatpush1.bf16.msra.mxu0 0
    %2184 = vmatprep.subr.bf16.mxu0 0
    %2185 = vmatpush1.bf16.msra.mxu0 0
    %2186 = vmatprep.subr.bf16.mxu0 0
    %2187 = vmatpush1.bf16.msra.mxu0 0
    %2188 = vmatprep.mubr.bf16.mxu0 0
    %2189 = vmatmul.mubr.bf16.gmra.mrb[0].mxu0 %v2085
    %v2190 = vpop.f32.mrb[0].mxu0
    %v2191 = vadd.f32 %v2107, %v2190
    %v2192 = vpop.f32.mrb[0].mxu0
    %v2193 = vpop.f32.mrb[0].mxu0
    %v2194 = vpop.f32.mrb[0].mxu0
    %2195 = vdwg.mxu0
    %v2196 = vsel %vm1906, %v2191, -inf
    %2197 = vmax.xlane.f32.xlu0 %v2196
    %v2198 = vpop.xlane.xlu0 %2197
    %v2199 = vsub.f32 %v2191, %v2198
    %v2200 = vmul.f32 %v2199, 1.442695
    %v2201 = vpow.pop %v2200
    %v2202 = vsel %vm1906, %v2201, 0.0
    %2203 = vadd.xlane.f32.xlu0 %v2202
    %v2204 = vpop.xlane.xlu0 %2203
    %v2205 = vrcp.pop %v2204
    %v2206 = vmul.f32 %v2201, %v2205
    %2207 = vst [vmem:[#allocation9] sm:$0x3] %v2206
    // Predicated region
    $region26: #{tpu_custom_call.1} parent=1 // pred_check
      _
    $region27: #{tpu_custom_call.1} parent=1 // pred_check_branch
      %2209 = sbr.rel (0) target = $region29
    $region28: #{tpu_custom_call.1} parent=1 // pred_region
      %s2211 = ssub.s32 32, 32
      %2212 = vsyncadd [#allocation5], %s2211
      %s2214 = sshll.u32 [#allocation9], 4
      %s2215 = int_to_ptr.vmem [resolvable:$true] %s2214
      %2217 = dma.vmem_to_hbm [thread:$0]  %s2215, 32, %s3, [#allocation5]
    $region29: #{tpu_custom_call.1} parent=1 // pred_fallthru
      _
    // Predicated region
    $region30: #{tpu_custom_call.1} parent=1 // pred_check
      _
    $region31: #{tpu_custom_call.1} parent=1 // pred_check_branch
      %2219 = sbr.rel (0) target = $region33
    $region32: #{tpu_custom_call.1} parent=1 // pred_region
      %2220 = dma.done [#allocation5], 32
    $region33: #{tpu_custom_call.1} parent=1 // pred_fallthru
      _
    %2221 = vsyncpa [#allocation4], 1
    %2222 = vsyncpa [#allocation7], 1
    %2223 = vsyncpa [#allocation5], 1

</llo_original>
